<compile_context>
chip_gen: v7x
topology: tpu7x:2x2x1
jax: 0.10.0
libtpu: 0.0.40
codegen_flags: <defaults>
</compile_context>

<pallas_src>
import functools

import jax
import jax.numpy as jnp
from jax import lax
from jax.experimental import pallas as pl
from jax.experimental.pallas import tpu as pltpu


def _transformer_block_kernel(
    x_ref, mask_ref, wqkv_ref, wout_ref, ln_g_ref, ln_b_ref,
    w1_ref, b1_ref, prelu_ref, w2_ref, b2_ref,
    out_ref, *, num_heads, d_model, seq_len, batch_tile, mxu_dtype,
):
    """One batch-tile (bt whole batches = bt*L rows) per grid step."""
    hd = d_model // num_heads
    rows = batch_tile * seq_len
    scale = 1.0 / (d_model ** 0.5)          # note: scaled by d_model (as in ref)

    x = x_ref[...].astype(jnp.float32)                      # (rows, D)
    mask = mask_ref[...].astype(jnp.float32)[None, :, :]    # (1, L, L) -> bcast

    # ---- QKV projection (no bias): one big MXU pass over all rows --------
    qkv = jnp.dot(x.astype(mxu_dtype), wqkv_ref[...],
                  preferred_element_type=jnp.float32)       # (rows, 3D) f32

    # ---- multi-head attention with the output projection fused per head --
    # acc starts at the residual x, so LayerNorm(to_out(att) + x) needs no
    # extra add at the end.
    acc = x
    for h in range(num_heads):
        lo = h * hd
        q_h = (qkv[:, lo:lo + hd] * scale).astype(mxu_dtype)            # (rows, hd)
        k_h = qkv[:, d_model + lo:d_model + lo + hd].astype(mxu_dtype)
        v_h = qkv[:, 2 * d_model + lo:2 * d_model + lo + hd].astype(mxu_dtype)

        q3 = q_h.reshape(batch_tile, seq_len, hd)
        k3 = k_h.reshape(batch_tile, seq_len, hd)
        v3 = v_h.reshape(batch_tile, seq_len, hd)

        # batched over the bt batches in this tile; contraction on hd,
        # no transposed operand materialized.
        e = jnp.einsum('bqd,bkd->bqk', q3, k3,
                       preferred_element_type=jnp.float32)              # (bt, L, L)
        e = e + mask

        m = jnp.max(e, axis=-1, keepdims=True)
        # Clamp fully-masked rows (m == -inf) to a finite value so exp() -> 0
        # and the row sum is 0; with the s == 0 guard below this reproduces
        # torch.nan_to_num(softmax(...)) == 0 without an isnan pass.
        m = jnp.maximum(m, jnp.float32(-1e30))
        p = jnp.exp(e - m)
        s = jnp.sum(p, axis=-1, keepdims=True)
        s = jnp.where(s == 0.0, jnp.float32(1.0), s)
        att = (p * pl.reciprocal(s, approx=True)).astype(mxu_dtype)

        o3 = jnp.einsum('bqk,bkd->bqd', att, v3,
                        preferred_element_type=jnp.float32)             # (bt, L, hd)
        o_h = o3.reshape(rows, hd).astype(mxu_dtype)

        # Fused concat + to_out:  out_att @ W_out == sum_h o_h @ W_out[rows_h]
        w_h = wout_ref[lo:lo + hd, :]                                   # (hd, D) bf16
        acc = acc + jnp.dot(o_h, w_h, preferred_element_type=jnp.float32)

    gamma = ln_g_ref[...]                                   # (1, D) f32
    beta = ln_b_ref[...]                                    # (1, D) f32

    def layer_norm(t):
        mu = jnp.mean(t, axis=-1, keepdims=True)
        var = jnp.mean((t - mu) ** 2, axis=-1, keepdims=True)
        return (t - mu) * lax.rsqrt(var + 1e-5) * gamma + beta

    h1 = layer_norm(acc)                                    # LN(to_out(att) + x)

    # ---- MLP: Linear(D,4D) -> PReLU -> Dropout(identity) -> Linear(4D,D) --
    z = jnp.dot(h1.astype(mxu_dtype), w1_ref[...],
                preferred_element_type=jnp.float32) + b1_ref[...]
    alpha = prelu_ref[...]                                  # (1, 1) PReLU weight
    z = jnp.where(z >= 0.0, z, z * alpha)
    # TODO(synk): dropout omitted (inference-mode identity).
    z = jnp.dot(z.astype(mxu_dtype), w2_ref[...],
                preferred_element_type=jnp.float32) + b2_ref[...]

    out_ref[...] = layer_norm(z + h1).astype(out_ref.dtype)


def _pick_batch_tile(batch, seq_len, target_rows=256):
    """Largest divisor of `batch` whose row count bt*L is <= ~target_rows."""
    bt = max(1, min(batch, max(1, target_rows // max(seq_len, 1))))
    while batch % bt:
        bt -= 1
    return bt


def transformer_block(x, mask, params, num_heads, *, mxu_dtype=jnp.bfloat16):
    B, L, D = x.shape
    assert D % num_heads == 0
    wqkv_t, wout_t, ln_g, ln_b, w1_t, b1, prelu, w2_t, b2 = params

    bt = _pick_batch_tile(B, L)
    rows = bt * L
    grid = (B // bt,)

    # Fold batch into the matmul M dimension (2-D, lane-dense blocks).
    x2 = x.reshape(B * L, D)

    # bf16 MXU feed: cast weights once here (halves weight DMA).  Biases,
    # LayerNorm params and PReLU stay f32.
    wqkv_c = wqkv_t.astype(mxu_dtype)
    wout_c = wout_t.astype(mxu_dtype)
    w1_c = w1_t.astype(mxu_dtype)
    w2_c = w2_t.astype(mxu_dtype)

    kernel = functools.partial(
        _transformer_block_kernel, num_heads=num_heads, d_model=D,
        seq_len=L, batch_tile=bt, mxu_dtype=mxu_dtype,
    )

    def const(shape):
        zeros = (0,) * len(shape)
        return pl.BlockSpec(shape, lambda i, _z=zeros: _z)

    hd = D // num_heads
    flops = 2 * B * L * D * 3 * D                       # QKV projection
    flops += 2 * B * num_heads * L * L * hd * 2         # QK^T and att@V
    flops += 2 * B * L * D * D                          # output projection
    flops += 2 * B * L * D * 4 * D * 2                  # MLP
    bytes_accessed = (
        2 * x2.size * x2.dtype.itemsize                 # x in + out
        + mask.size * mask.dtype.itemsize
        + sum(int(w.size) * w.dtype.itemsize
              for w in (wqkv_c, wout_c, w1_c, w2_c, ln_g, ln_b, b1, prelu, b2))
    )

    out2 = pl.pallas_call(
        kernel,
        out_shape=jax.ShapeDtypeStruct((B * L, D), x.dtype),
        grid=grid,
        in_specs=[
            pl.BlockSpec((rows, D), lambda i: (i, 0)),   # x rows (bt batches)
            const((L, L)),                                # additive mask
            const((D, 3 * D)),                            # W_qkv^T (bf16)
            const((D, D)),                                # W_out^T (bf16)
            const((1, D)),                                # ln gamma
            const((1, D)),                                # ln beta
            const((D, 4 * D)),                            # mlp W1^T (bf16)
            const((1, 4 * D)),                            # mlp b1
            const((1, 1)),                                # prelu alpha
            const((4 * D, D)),                            # mlp W2^T (bf16)
            const((1, D)),                                # mlp b2
        ],
        out_specs=pl.BlockSpec((rows, D), lambda i: (i, 0)),
        compiler_params=pltpu.CompilerParams(
            dimension_semantics=("parallel",)),
        cost_estimate=pl.CostEstimate(
            flops=int(flops),
            transcendentals=int(B * num_heads * L * L),
            bytes_accessed=int(bytes_accessed)),
    )(x2, mask, wqkv_c, wout_c, ln_g, ln_b, w1_c, b1, prelu, w2_c, b2)

    return out2.reshape(B, L, D)


def reference(x, mask, params, num_heads):
    """Pure-JAX f32 mirror of the PyTorch forward for validation."""
    wqkv_t, wout_t, ln_g, ln_b, w1_t, b1, prelu, w2_t, b2 = params
    B, L, D = x.shape
    hd = D // num_heads
    qkv = x @ wqkv_t
    q, k, v = qkv[..., :D], qkv[..., D:2 * D], qkv[..., 2 * D:]

    def split(t):
        return t.reshape(B, L, num_heads, hd).transpose(0, 2, 1, 3)

    q, k, v = split(q), split(k), split(v)
    q = q * (1.0 / D ** 0.5)
    e = jnp.einsum('bhlj,bhkj->bhlk', q, k) + mask
    att = jnp.nan_to_num(jax.nn.softmax(e, axis=-1))
    oa = jnp.einsum('bhlk,bhkj->bhlj', att, v)
    oa = oa.transpose(0, 2, 1, 3).reshape(B, L, D)
    oa = oa @ wout_t

    def ln(t):
        mu = t.mean(-1, keepdims=True)
        var = ((t - mu) ** 2).mean(-1, keepdims=True)
        return (t - mu) / jnp.sqrt(var + 1e-5) * ln_g + ln_b

    h1 = ln(oa + x)
    z = h1 @ w1_t + b1
    z = jnp.where(z >= 0, z, prelu * z)
    z = z @ w2_t + b2
    return ln(z + h1)


if __name__ == "__main__":
    B, L, D, H = 2, 8, 32, 4

    key = jax.random.PRNGKey(0)
    ks = jax.random.split(key, 10)

    wqkv_t = 0.1 * jax.random.normal(ks[0], (D, 3 * D), jnp.float32)
    wout_t = 0.1 * jax.random.normal(ks[1], (D, D), jnp.float32)
    ln_g = jnp.ones((1, D), jnp.float32) + 0.05 * jax.random.normal(ks[2], (1, D))
    ln_b = 0.05 * jax.random.normal(ks[3], (1, D), jnp.float32)
    w1_t = 0.1 * jax.random.normal(ks[4], (D, 4 * D), jnp.float32)
    b1 = 0.1 * jax.random.normal(ks[5], (1, 4 * D), jnp.float32)
    prelu = jnp.full((1, 1), 0.01, jnp.float32)        # nn.PReLU(init=0.01)
    w2_t = 0.1 * jax.random.normal(ks[6], (4 * D, D), jnp.float32)
    b2 = 0.1 * jax.random.normal(ks[7], (1, D), jnp.float32)
    params = (wqkv_t, wout_t, ln_g, ln_b, w1_t, b1, prelu, w2_t, b2)

    x = jax.random.normal(ks[8], (B, L, D), jnp.float32)
    # causal additive mask, broadcasts over (B, H)
    mask = jnp.where(
        jnp.tril(jnp.ones((L, L), bool)), 0.0, -jnp.inf
    ).astype(jnp.float32)

    out = transformer_block(x, mask, params, num_heads=H)
    out = jax.block_until_ready(out)

    with jax.default_matmul_precision("highest"):
        ref = reference(x, mask, params, num_heads=H)

    assert out.shape == (B, L, D)
    # bf16 MXU feeds in the kernel vs. f32 "highest" reference -> loose tol.
    assert jnp.allclose(out, ref, rtol=5e-2, atol=5e-2), (
        float(jnp.max(jnp.abs(out - ref)))
    )
    print("KERNEL_OK")
</pallas_src>

<mosaic_0001>
module attributes {stable_mosaic.version = 11 : i64} {
  func.func @_transformer_block_kernel(%arg0: i32, %arg1: memref<16x32xf32, #tpu.memory_space<vmem>>, %arg2: memref<8x8xf32, #tpu.memory_space<vmem>>, %arg3: memref<32x96xbf16, #tpu.memory_space<vmem>>, %arg4: memref<32x32xbf16, #tpu.memory_space<vmem>>, %arg5: memref<1x32xf32, #tpu.memory_space<vmem>>, %arg6: memref<1x32xf32, #tpu.memory_space<vmem>>, %arg7: memref<32x128xbf16, #tpu.memory_space<vmem>>, %arg8: memref<1x128xf32, #tpu.memory_space<vmem>>, %arg9: memref<1x1xf32, #tpu.memory_space<vmem>>, %arg10: memref<128x32xbf16, #tpu.memory_space<vmem>>, %arg11: memref<1x32xf32, #tpu.memory_space<vmem>>, %arg12: memref<16x32xf32, #tpu.memory_space<vmem>>) attributes {dimension_semantics = [#tpu.dimension_semantics<parallel>], iteration_bounds = array<i64: 1>, scalar_prefetch = 0 : i64, scratch_operands = 0 : i64, tpu.core_type = #tpu.core_type<tc>, window_params = [{transform_indices = @transform_0, window_bounds = array<i64: 16, 32>}, {pipeline_mode = #tpu.pipeline_mode<synchronous>, transform_indices = @transform_1, window_bounds = array<i64: 8, 8>}, {pipeline_mode = #tpu.pipeline_mode<synchronous>, transform_indices = @transform_2, window_bounds = array<i64: 32, 96>}, {pipeline_mode = #tpu.pipeline_mode<synchronous>, transform_indices = @transform_3, window_bounds = array<i64: 32, 32>}, {pipeline_mode = #tpu.pipeline_mode<synchronous>, transform_indices = @transform_4, window_bounds = array<i64: 1, 32>}, {pipeline_mode = #tpu.pipeline_mode<synchronous>, transform_indices = @transform_5, window_bounds = array<i64: 1, 32>}, {pipeline_mode = #tpu.pipeline_mode<synchronous>, transform_indices = @transform_6, window_bounds = array<i64: 32, 128>}, {pipeline_mode = #tpu.pipeline_mode<synchronous>, transform_indices = @transform_7, window_bounds = array<i64: 1, 128>}, {pipeline_mode = #tpu.pipeline_mode<synchronous>, transform_indices = @transform_8, window_bounds = array<i64: 1, 1>}, {pipeline_mode = #tpu.pipeline_mode<synchronous>, transform_indices = @transform_9, window_bounds = array<i64: 128, 32>}, {pipeline_mode = #tpu.pipeline_mode<synchronous>, transform_indices = @transform_10, window_bounds = array<i64: 1, 32>}, {transform_indices = @transform_11, window_bounds = array<i64: 16, 32>}]} {
    %c0 = arith.constant 0 : index
    %c0_0 = arith.constant 0 : index
    %0 = vector.load %arg1[%c0, %c0_0] : memref<16x32xf32, #tpu.memory_space<vmem>>, vector<16x32xf32>
    %c0_1 = arith.constant 0 : index
    %c0_2 = arith.constant 0 : index
    %1 = vector.load %arg2[%c0_1, %c0_2] : memref<8x8xf32, #tpu.memory_space<vmem>>, vector<8x8xf32>
    %2 = vector.shape_cast %1 : vector<8x8xf32> to vector<1x8x8xf32>
    %3 = arith.truncf %0 : vector<16x32xf32> to vector<16x32xbf16>
    %c0_3 = arith.constant 0 : index
    %c0_4 = arith.constant 0 : index
    %4 = vector.load %arg3[%c0_3, %c0_4] : memref<32x96xbf16, #tpu.memory_space<vmem>>, vector<32x96xbf16>
    %cst = arith.constant dense<0.000000e+00> : vector<16x96xf32>
    %5 = tpu.matmul %3, %4, %cst {dimension_numbers = #tpu.dot_dimension_numbers<[1], [0], [0], [1], [0, 0, 1, 1], [], []>} : vector<16x32xbf16>, vector<32x96xbf16>, vector<16x96xf32> -> vector<16x96xf32>
    %6 = vector.extract_strided_slice %5 {offsets = [0, 0], sizes = [16, 8], strides = [1, 1]} : vector<16x96xf32> to vector<16x8xf32>
    %cst_5 = arith.constant 0.176776692 : f32
    %7 = vector.broadcast %cst_5 : f32 to vector<16x8xf32>
    %8 = arith.mulf %6, %7 : vector<16x8xf32>
    %9 = arith.truncf %8 : vector<16x8xf32> to vector<16x8xbf16>
    %10 = vector.extract_strided_slice %5 {offsets = [0, 32], sizes = [16, 8], strides = [1, 1]} : vector<16x96xf32> to vector<16x8xf32>
    %11 = arith.truncf %10 : vector<16x8xf32> to vector<16x8xbf16>
    %12 = vector.extract_strided_slice %5 {offsets = [0, 64], sizes = [16, 8], strides = [1, 1]} : vector<16x96xf32> to vector<16x8xf32>
    %13 = arith.truncf %12 : vector<16x8xf32> to vector<16x8xbf16>
    %14 = vector.shape_cast %9 : vector<16x8xbf16> to vector<2x8x8xbf16>
    %15 = vector.shape_cast %11 : vector<16x8xbf16> to vector<2x8x8xbf16>
    %16 = vector.shape_cast %13 : vector<16x8xbf16> to vector<2x8x8xbf16>
    "tpu.trace_start"() <{level = 10 : i32, message = "bqd,bkd->bqk"}> : () -> ()
    %cst_6 = arith.constant dense<0.000000e+00> : vector<2x8x8xf32>
    %17 = tpu.matmul %14, %15, %cst_6 {dimension_numbers = #tpu.dot_dimension_numbers<[2], [2], [1], [1], [0, 0, 0, 1, 1, 1], [0], [0]>} : vector<2x8x8xbf16>, vector<2x8x8xbf16>, vector<2x8x8xf32> -> vector<2x8x8xf32>
    "tpu.trace_stop"() : () -> ()
    %18 = vector.broadcast %2 : vector<1x8x8xf32> to vector<2x8x8xf32>
    %19 = arith.addf %17, %18 : vector<2x8x8xf32>
    %cst_7 = arith.constant dense<0xFF800000> : vector<2x8xf32>
    %20 = vector.multi_reduction <maximumf>, %19, %cst_7 [2] : vector<2x8x8xf32> to vector<2x8xf32>
    %21 = vector.shape_cast %20 : vector<2x8xf32> to vector<2x8x1xf32>
    %cst_8 = arith.constant -1.000000e+30 : f32
    %22 = vector.broadcast %cst_8 : f32 to vector<2x8x1xf32>
    %23 = arith.maximumf %21, %22 : vector<2x8x1xf32>
    %24 = vector.broadcast %23 : vector<2x8x1xf32> to vector<2x8x8xf32>
    %25 = arith.subf %19, %24 : vector<2x8x8xf32>
    %26 = math.exp %25 : vector<2x8x8xf32>
    %cst_9 = arith.constant dense<0.000000e+00> : vector<2x8xf32>
    %27 = vector.multi_reduction <add>, %26, %cst_9 [2] : vector<2x8x8xf32> to vector<2x8xf32>
    %28 = vector.shape_cast %27 : vector<2x8xf32> to vector<2x8x1xf32>
    %cst_10 = arith.constant 0.000000e+00 : f32
    %29 = vector.broadcast %cst_10 : f32 to vector<2x8x1xf32>
    %30 = arith.cmpf oeq, %28, %29 : vector<2x8x1xf32>
    %cst_11 = arith.constant 1.000000e+00 : f32
    %31 = vector.broadcast %cst_11 : f32 to vector<2x8x1xf32>
    %32 = arith.select %30, %31, %28 : vector<2x8x1xi1>, vector<2x8x1xf32>
    %33 = tpu.reciprocal %32 {approx = true} : vector<2x8x1xf32> -> vector<2x8x1xf32>
    %34 = vector.broadcast %33 : vector<2x8x1xf32> to vector<2x8x8xf32>
    %35 = arith.mulf %26, %34 : vector<2x8x8xf32>
    %36 = arith.truncf %35 : vector<2x8x8xf32> to vector<2x8x8xbf16>
    "tpu.trace_start"() <{level = 10 : i32, message = "bqk,bkd->bqd"}> : () -> ()
    %cst_12 = arith.constant dense<0.000000e+00> : vector<2x8x8xf32>
    %37 = tpu.matmul %36, %16, %cst_12 {dimension_numbers = #tpu.dot_dimension_numbers<[2], [1], [1], [2], [0, 0, 0, 1, 1, 2], [0], [0]>} : vector<2x8x8xbf16>, vector<2x8x8xbf16>, vector<2x8x8xf32> -> vector<2x8x8xf32>
    "tpu.trace_stop"() : () -> ()
    %38 = vector.shape_cast %37 : vector<2x8x8xf32> to vector<16x8xf32>
    %39 = arith.truncf %38 : vector<16x8xf32> to vector<16x8xbf16>
    %c0_13 = arith.constant 0 : index
    %c0_14 = arith.constant 0 : index
    %40 = vector.load %arg4[%c0_13, %c0_14] : memref<32x32xbf16, #tpu.memory_space<vmem>>, vector<8x32xbf16>
    %cst_15 = arith.constant dense<0.000000e+00> : vector<16x32xf32>
    %41 = tpu.matmul %39, %40, %cst_15 {dimension_numbers = #tpu.dot_dimension_numbers<[1], [0], [0], [1], [0, 0, 1, 1], [], []>} : vector<16x8xbf16>, vector<8x32xbf16>, vector<16x32xf32> -> vector<16x32xf32>
    %42 = arith.addf %0, %41 : vector<16x32xf32>
    %43 = vector.extract_strided_slice %5 {offsets = [0, 8], sizes = [16, 8], strides = [1, 1]} : vector<16x96xf32> to vector<16x8xf32>
    %cst_16 = arith.constant 0.176776692 : f32
    %44 = vector.broadcast %cst_16 : f32 to vector<16x8xf32>
    %45 = arith.mulf %43, %44 : vector<16x8xf32>
    %46 = arith.truncf %45 : vector<16x8xf32> to vector<16x8xbf16>
    %47 = vector.extract_strided_slice %5 {offsets = [0, 40], sizes = [16, 8], strides = [1, 1]} : vector<16x96xf32> to vector<16x8xf32>
    %48 = arith.truncf %47 : vector<16x8xf32> to vector<16x8xbf16>
    %49 = vector.extract_strided_slice %5 {offsets = [0, 72], sizes = [16, 8], strides = [1, 1]} : vector<16x96xf32> to vector<16x8xf32>
    %50 = arith.truncf %49 : vector<16x8xf32> to vector<16x8xbf16>
    %51 = vector.shape_cast %46 : vector<16x8xbf16> to vector<2x8x8xbf16>
    %52 = vector.shape_cast %48 : vector<16x8xbf16> to vector<2x8x8xbf16>
    %53 = vector.shape_cast %50 : vector<16x8xbf16> to vector<2x8x8xbf16>
    "tpu.trace_start"() <{level = 10 : i32, message = "bqd,bkd->bqk"}> : () -> ()
    %cst_17 = arith.constant dense<0.000000e+00> : vector<2x8x8xf32>
    %54 = tpu.matmul %51, %52, %cst_17 {dimension_numbers = #tpu.dot_dimension_numbers<[2], [2], [1], [1], [0, 0, 0, 1, 1, 1], [0], [0]>} : vector<2x8x8xbf16>, vector<2x8x8xbf16>, vector<2x8x8xf32> -> vector<2x8x8xf32>
    "tpu.trace_stop"() : () -> ()
    %55 = vector.broadcast %2 : vector<1x8x8xf32> to vector<2x8x8xf32>
    %56 = arith.addf %54, %55 : vector<2x8x8xf32>
    %cst_18 = arith.constant dense<0xFF800000> : vector<2x8xf32>
    %57 = vector.multi_reduction <maximumf>, %56, %cst_18 [2] : vector<2x8x8xf32> to vector<2x8xf32>
    %58 = vector.shape_cast %57 : vector<2x8xf32> to vector<2x8x1xf32>
    %cst_19 = arith.constant -1.000000e+30 : f32
    %59 = vector.broadcast %cst_19 : f32 to vector<2x8x1xf32>
    %60 = arith.maximumf %58, %59 : vector<2x8x1xf32>
    %61 = vector.broadcast %60 : vector<2x8x1xf32> to vector<2x8x8xf32>
    %62 = arith.subf %56, %61 : vector<2x8x8xf32>
    %63 = math.exp %62 : vector<2x8x8xf32>
    %cst_20 = arith.constant dense<0.000000e+00> : vector<2x8xf32>
    %64 = vector.multi_reduction <add>, %63, %cst_20 [2] : vector<2x8x8xf32> to vector<2x8xf32>
    %65 = vector.shape_cast %64 : vector<2x8xf32> to vector<2x8x1xf32>
    %cst_21 = arith.constant 0.000000e+00 : f32
    %66 = vector.broadcast %cst_21 : f32 to vector<2x8x1xf32>
    %67 = arith.cmpf oeq, %65, %66 : vector<2x8x1xf32>
    %cst_22 = arith.constant 1.000000e+00 : f32
    %68 = vector.broadcast %cst_22 : f32 to vector<2x8x1xf32>
    %69 = arith.select %67, %68, %65 : vector<2x8x1xi1>, vector<2x8x1xf32>
    %70 = tpu.reciprocal %69 {approx = true} : vector<2x8x1xf32> -> vector<2x8x1xf32>
    %71 = vector.broadcast %70 : vector<2x8x1xf32> to vector<2x8x8xf32>
    %72 = arith.mulf %63, %71 : vector<2x8x8xf32>
    %73 = arith.truncf %72 : vector<2x8x8xf32> to vector<2x8x8xbf16>
    "tpu.trace_start"() <{level = 10 : i32, message = "bqk,bkd->bqd"}> : () -> ()
    %cst_23 = arith.constant dense<0.000000e+00> : vector<2x8x8xf32>
    %74 = tpu.matmul %73, %53, %cst_23 {dimension_numbers = #tpu.dot_dimension_numbers<[2], [1], [1], [2], [0, 0, 0, 1, 1, 2], [0], [0]>} : vector<2x8x8xbf16>, vector<2x8x8xbf16>, vector<2x8x8xf32> -> vector<2x8x8xf32>
    "tpu.trace_stop"() : () -> ()
    %75 = vector.shape_cast %74 : vector<2x8x8xf32> to vector<16x8xf32>
    %76 = arith.truncf %75 : vector<16x8xf32> to vector<16x8xbf16>
    %c8 = arith.constant 8 : index
    %c0_24 = arith.constant 0 : index
    %77 = vector.load %arg4[%c8, %c0_24] : memref<32x32xbf16, #tpu.memory_space<vmem>>, vector<8x32xbf16>
    %cst_25 = arith.constant dense<0.000000e+00> : vector<16x32xf32>
    %78 = tpu.matmul %76, %77, %cst_25 {dimension_numbers = #tpu.dot_dimension_numbers<[1], [0], [0], [1], [0, 0, 1, 1], [], []>} : vector<16x8xbf16>, vector<8x32xbf16>, vector<16x32xf32> -> vector<16x32xf32>
    %79 = arith.addf %42, %78 : vector<16x32xf32>
    %80 = vector.extract_strided_slice %5 {offsets = [0, 16], sizes = [16, 8], strides = [1, 1]} : vector<16x96xf32> to vector<16x8xf32>
    %cst_26 = arith.constant 0.176776692 : f32
    %81 = vector.broadcast %cst_26 : f32 to vector<16x8xf32>
    %82 = arith.mulf %80, %81 : vector<16x8xf32>
    %83 = arith.truncf %82 : vector<16x8xf32> to vector<16x8xbf16>
    %84 = vector.extract_strided_slice %5 {offsets = [0, 48], sizes = [16, 8], strides = [1, 1]} : vector<16x96xf32> to vector<16x8xf32>
    %85 = arith.truncf %84 : vector<16x8xf32> to vector<16x8xbf16>
    %86 = vector.extract_strided_slice %5 {offsets = [0, 80], sizes = [16, 8], strides = [1, 1]} : vector<16x96xf32> to vector<16x8xf32>
    %87 = arith.truncf %86 : vector<16x8xf32> to vector<16x8xbf16>
    %88 = vector.shape_cast %83 : vector<16x8xbf16> to vector<2x8x8xbf16>
    %89 = vector.shape_cast %85 : vector<16x8xbf16> to vector<2x8x8xbf16>
    %90 = vector.shape_cast %87 : vector<16x8xbf16> to vector<2x8x8xbf16>
    "tpu.trace_start"() <{level = 10 : i32, message = "bqd,bkd->bqk"}> : () -> ()
    %cst_27 = arith.constant dense<0.000000e+00> : vector<2x8x8xf32>
    %91 = tpu.matmul %88, %89, %cst_27 {dimension_numbers = #tpu.dot_dimension_numbers<[2], [2], [1], [1], [0, 0, 0, 1, 1, 1], [0], [0]>} : vector<2x8x8xbf16>, vector<2x8x8xbf16>, vector<2x8x8xf32> -> vector<2x8x8xf32>
    "tpu.trace_stop"() : () -> ()
    %92 = vector.broadcast %2 : vector<1x8x8xf32> to vector<2x8x8xf32>
    %93 = arith.addf %91, %92 : vector<2x8x8xf32>
    %cst_28 = arith.constant dense<0xFF800000> : vector<2x8xf32>
    %94 = vector.multi_reduction <maximumf>, %93, %cst_28 [2] : vector<2x8x8xf32> to vector<2x8xf32>
    %95 = vector.shape_cast %94 : vector<2x8xf32> to vector<2x8x1xf32>
    %cst_29 = arith.constant -1.000000e+30 : f32
    %96 = vector.broadcast %cst_29 : f32 to vector<2x8x1xf32>
    %97 = arith.maximumf %95, %96 : vector<2x8x1xf32>
    %98 = vector.broadcast %97 : vector<2x8x1xf32> to vector<2x8x8xf32>
    %99 = arith.subf %93, %98 : vector<2x8x8xf32>
    %100 = math.exp %99 : vector<2x8x8xf32>
    %cst_30 = arith.constant dense<0.000000e+00> : vector<2x8xf32>
    %101 = vector.multi_reduction <add>, %100, %cst_30 [2] : vector<2x8x8xf32> to vector<2x8xf32>
    %102 = vector.shape_cast %101 : vector<2x8xf32> to vector<2x8x1xf32>
    %cst_31 = arith.constant 0.000000e+00 : f32
    %103 = vector.broadcast %cst_31 : f32 to vector<2x8x1xf32>
    %104 = arith.cmpf oeq, %102, %103 : vector<2x8x1xf32>
    %cst_32 = arith.constant 1.000000e+00 : f32
    %105 = vector.broadcast %cst_32 : f32 to vector<2x8x1xf32>
    %106 = arith.select %104, %105, %102 : vector<2x8x1xi1>, vector<2x8x1xf32>
    %107 = tpu.reciprocal %106 {approx = true} : vector<2x8x1xf32> -> vector<2x8x1xf32>
    %108 = vector.broadcast %107 : vector<2x8x1xf32> to vector<2x8x8xf32>
    %109 = arith.mulf %100, %108 : vector<2x8x8xf32>
    %110 = arith.truncf %109 : vector<2x8x8xf32> to vector<2x8x8xbf16>
    "tpu.trace_start"() <{level = 10 : i32, message = "bqk,bkd->bqd"}> : () -> ()
    %cst_33 = arith.constant dense<0.000000e+00> : vector<2x8x8xf32>
    %111 = tpu.matmul %110, %90, %cst_33 {dimension_numbers = #tpu.dot_dimension_numbers<[2], [1], [1], [2], [0, 0, 0, 1, 1, 2], [0], [0]>} : vector<2x8x8xbf16>, vector<2x8x8xbf16>, vector<2x8x8xf32> -> vector<2x8x8xf32>
    "tpu.trace_stop"() : () -> ()
    %112 = vector.shape_cast %111 : vector<2x8x8xf32> to vector<16x8xf32>
    %113 = arith.truncf %112 : vector<16x8xf32> to vector<16x8xbf16>
    %c16 = arith.constant 16 : index
    %c0_34 = arith.constant 0 : index
    %114 = vector.load %arg4[%c16, %c0_34] : memref<32x32xbf16, #tpu.memory_space<vmem>>, vector<8x32xbf16>
    %cst_35 = arith.constant dense<0.000000e+00> : vector<16x32xf32>
    %115 = tpu.matmul %113, %114, %cst_35 {dimension_numbers = #tpu.dot_dimension_numbers<[1], [0], [0], [1], [0, 0, 1, 1], [], []>} : vector<16x8xbf16>, vector<8x32xbf16>, vector<16x32xf32> -> vector<16x32xf32>
    %116 = arith.addf %79, %115 : vector<16x32xf32>
    %117 = vector.extract_strided_slice %5 {offsets = [0, 24], sizes = [16, 8], strides = [1, 1]} : vector<16x96xf32> to vector<16x8xf32>
    %cst_36 = arith.constant 0.176776692 : f32
    %118 = vector.broadcast %cst_36 : f32 to vector<16x8xf32>
    %119 = arith.mulf %117, %118 : vector<16x8xf32>
    %120 = arith.truncf %119 : vector<16x8xf32> to vector<16x8xbf16>
    %121 = vector.extract_strided_slice %5 {offsets = [0, 56], sizes = [16, 8], strides = [1, 1]} : vector<16x96xf32> to vector<16x8xf32>
    %122 = arith.truncf %121 : vector<16x8xf32> to vector<16x8xbf16>
    %123 = vector.extract_strided_slice %5 {offsets = [0, 88], sizes = [16, 8], strides = [1, 1]} : vector<16x96xf32> to vector<16x8xf32>
    %124 = arith.truncf %123 : vector<16x8xf32> to vector<16x8xbf16>
    %125 = vector.shape_cast %120 : vector<16x8xbf16> to vector<2x8x8xbf16>
    %126 = vector.shape_cast %122 : vector<16x8xbf16> to vector<2x8x8xbf16>
    %127 = vector.shape_cast %124 : vector<16x8xbf16> to vector<2x8x8xbf16>
    "tpu.trace_start"() <{level = 10 : i32, message = "bqd,bkd->bqk"}> : () -> ()
    %cst_37 = arith.constant dense<0.000000e+00> : vector<2x8x8xf32>
    %128 = tpu.matmul %125, %126, %cst_37 {dimension_numbers = #tpu.dot_dimension_numbers<[2], [2], [1], [1], [0, 0, 0, 1, 1, 1], [0], [0]>} : vector<2x8x8xbf16>, vector<2x8x8xbf16>, vector<2x8x8xf32> -> vector<2x8x8xf32>
    "tpu.trace_stop"() : () -> ()
    %129 = vector.broadcast %2 : vector<1x8x8xf32> to vector<2x8x8xf32>
    %130 = arith.addf %128, %129 : vector<2x8x8xf32>
    %cst_38 = arith.constant dense<0xFF800000> : vector<2x8xf32>
    %131 = vector.multi_reduction <maximumf>, %130, %cst_38 [2] : vector<2x8x8xf32> to vector<2x8xf32>
    %132 = vector.shape_cast %131 : vector<2x8xf32> to vector<2x8x1xf32>
    %cst_39 = arith.constant -1.000000e+30 : f32
    %133 = vector.broadcast %cst_39 : f32 to vector<2x8x1xf32>
    %134 = arith.maximumf %132, %133 : vector<2x8x1xf32>
    %135 = vector.broadcast %134 : vector<2x8x1xf32> to vector<2x8x8xf32>
    %136 = arith.subf %130, %135 : vector<2x8x8xf32>
    %137 = math.exp %136 : vector<2x8x8xf32>
    %cst_40 = arith.constant dense<0.000000e+00> : vector<2x8xf32>
    %138 = vector.multi_reduction <add>, %137, %cst_40 [2] : vector<2x8x8xf32> to vector<2x8xf32>
    %139 = vector.shape_cast %138 : vector<2x8xf32> to vector<2x8x1xf32>
    %cst_41 = arith.constant 0.000000e+00 : f32
    %140 = vector.broadcast %cst_41 : f32 to vector<2x8x1xf32>
    %141 = arith.cmpf oeq, %139, %140 : vector<2x8x1xf32>
    %cst_42 = arith.constant 1.000000e+00 : f32
    %142 = vector.broadcast %cst_42 : f32 to vector<2x8x1xf32>
    %143 = arith.select %141, %142, %139 : vector<2x8x1xi1>, vector<2x8x1xf32>
    %144 = tpu.reciprocal %143 {approx = true} : vector<2x8x1xf32> -> vector<2x8x1xf32>
    %145 = vector.broadcast %144 : vector<2x8x1xf32> to vector<2x8x8xf32>
    %146 = arith.mulf %137, %145 : vector<2x8x8xf32>
    %147 = arith.truncf %146 : vector<2x8x8xf32> to vector<2x8x8xbf16>
    "tpu.trace_start"() <{level = 10 : i32, message = "bqk,bkd->bqd"}> : () -> ()
    %cst_43 = arith.constant dense<0.000000e+00> : vector<2x8x8xf32>
    %148 = tpu.matmul %147, %127, %cst_43 {dimension_numbers = #tpu.dot_dimension_numbers<[2], [1], [1], [2], [0, 0, 0, 1, 1, 2], [0], [0]>} : vector<2x8x8xbf16>, vector<2x8x8xbf16>, vector<2x8x8xf32> -> vector<2x8x8xf32>
    "tpu.trace_stop"() : () -> ()
    %149 = vector.shape_cast %148 : vector<2x8x8xf32> to vector<16x8xf32>
    %150 = arith.truncf %149 : vector<16x8xf32> to vector<16x8xbf16>
    %c24 = arith.constant 24 : index
    %c0_44 = arith.constant 0 : index
    %151 = vector.load %arg4[%c24, %c0_44] : memref<32x32xbf16, #tpu.memory_space<vmem>>, vector<8x32xbf16>
    %cst_45 = arith.constant dense<0.000000e+00> : vector<16x32xf32>
    %152 = tpu.matmul %150, %151, %cst_45 {dimension_numbers = #tpu.dot_dimension_numbers<[1], [0], [0], [1], [0, 0, 1, 1], [], []>} : vector<16x8xbf16>, vector<8x32xbf16>, vector<16x32xf32> -> vector<16x32xf32>
    %153 = arith.addf %116, %152 : vector<16x32xf32>
    %c0_46 = arith.constant 0 : index
    %c0_47 = arith.constant 0 : index
    %154 = vector.load %arg5[%c0_46, %c0_47] : memref<1x32xf32, #tpu.memory_space<vmem>>, vector<1x32xf32>
    %c0_48 = arith.constant 0 : index
    %c0_49 = arith.constant 0 : index
    %155 = vector.load %arg6[%c0_48, %c0_49] : memref<1x32xf32, #tpu.memory_space<vmem>>, vector<1x32xf32>
    %cst_50 = arith.constant dense<0.000000e+00> : vector<16xf32>
    %156 = vector.multi_reduction <add>, %153, %cst_50 [1] : vector<16x32xf32> to vector<16xf32>
    %157 = vector.shape_cast %156 : vector<16xf32> to vector<16x1xf32>
    %cst_51 = arith.constant 3.200000e+01 : f32
    %158 = vector.broadcast %cst_51 : f32 to vector<16x1xf32>
    %159 = arith.divf %157, %158 : vector<16x1xf32>
    %160 = vector.broadcast %159 : vector<16x1xf32> to vector<16x32xf32>
    %161 = arith.subf %153, %160 : vector<16x32xf32>
    %162 = arith.mulf %161, %161 : vector<16x32xf32>
    %cst_52 = arith.constant dense<0.000000e+00> : vector<16xf32>
    %163 = vector.multi_reduction <add>, %162, %cst_52 [1] : vector<16x32xf32> to vector<16xf32>
    %164 = vector.shape_cast %163 : vector<16xf32> to vector<16x1xf32>
    %cst_53 = arith.constant 3.200000e+01 : f32
    %165 = vector.broadcast %cst_53 : f32 to vector<16x1xf32>
    %166 = arith.divf %164, %165 : vector<16x1xf32>
    %167 = vector.broadcast %159 : vector<16x1xf32> to vector<16x32xf32>
    %168 = arith.subf %153, %167 : vector<16x32xf32>
    %cst_54 = arith.constant 9.99999974E-6 : f32
    %169 = vector.broadcast %cst_54 : f32 to vector<16x1xf32>
    %170 = arith.addf %166, %169 : vector<16x1xf32>
    %171 = math.rsqrt %170 : vector<16x1xf32>
    %172 = vector.broadcast %171 : vector<16x1xf32> to vector<16x32xf32>
    %173 = arith.mulf %168, %172 : vector<16x32xf32>
    %174 = vector.broadcast %154 : vector<1x32xf32> to vector<16x32xf32>
    %175 = arith.mulf %173, %174 : vector<16x32xf32>
    %176 = vector.broadcast %155 : vector<1x32xf32> to vector<16x32xf32>
    %177 = arith.addf %175, %176 : vector<16x32xf32>
    %178 = arith.truncf %177 : vector<16x32xf32> to vector<16x32xbf16>
    %c0_55 = arith.constant 0 : index
    %c0_56 = arith.constant 0 : index
    %179 = vector.load %arg7[%c0_55, %c0_56] : memref<32x128xbf16, #tpu.memory_space<vmem>>, vector<32x128xbf16>
    %cst_57 = arith.constant dense<0.000000e+00> : vector<16x128xf32>
    %180 = tpu.matmul %178, %179, %cst_57 {dimension_numbers = #tpu.dot_dimension_numbers<[1], [0], [0], [1], [0, 0, 1, 1], [], []>} : vector<16x32xbf16>, vector<32x128xbf16>, vector<16x128xf32> -> vector<16x128xf32>
    %c0_58 = arith.constant 0 : index
    %c0_59 = arith.constant 0 : index
    %181 = vector.load %arg8[%c0_58, %c0_59] : memref<1x128xf32, #tpu.memory_space<vmem>>, vector<1x128xf32>
    %182 = vector.broadcast %181 : vector<1x128xf32> to vector<16x128xf32>
    %183 = arith.addf %180, %182 : vector<16x128xf32>
    %c0_60 = arith.constant 0 : index
    %c0_61 = arith.constant 0 : index
    %184 = vector.load %arg9[%c0_60, %c0_61] : memref<1x1xf32, #tpu.memory_space<vmem>>, vector<1x1xf32>
    %cst_62 = arith.constant 0.000000e+00 : f32
    %185 = vector.broadcast %cst_62 : f32 to vector<16x128xf32>
    %186 = arith.cmpf oge, %183, %185 : vector<16x128xf32>
    %187 = vector.broadcast %184 : vector<1x1xf32> to vector<16x128xf32>
    %188 = arith.mulf %183, %187 : vector<16x128xf32>
    %189 = arith.select %186, %183, %188 : vector<16x128xi1>, vector<16x128xf32>
    %190 = arith.truncf %189 : vector<16x128xf32> to vector<16x128xbf16>
    %c0_63 = arith.constant 0 : index
    %c0_64 = arith.constant 0 : index
    %191 = vector.load %arg10[%c0_63, %c0_64] : memref<128x32xbf16, #tpu.memory_space<vmem>>, vector<128x32xbf16>
    %cst_65 = arith.constant dense<0.000000e+00> : vector<16x32xf32>
    %192 = tpu.matmul %190, %191, %cst_65 {dimension_numbers = #tpu.dot_dimension_numbers<[1], [0], [0], [1], [0, 0, 1, 1], [], []>} : vector<16x128xbf16>, vector<128x32xbf16>, vector<16x32xf32> -> vector<16x32xf32>
    %c0_66 = arith.constant 0 : index
    %c0_67 = arith.constant 0 : index
    %193 = vector.load %arg11[%c0_66, %c0_67] : memref<1x32xf32, #tpu.memory_space<vmem>>, vector<1x32xf32>
    %194 = vector.broadcast %193 : vector<1x32xf32> to vector<16x32xf32>
    %195 = arith.addf %192, %194 : vector<16x32xf32>
    %196 = arith.addf %195, %177 : vector<16x32xf32>
    %cst_68 = arith.constant dense<0.000000e+00> : vector<16xf32>
    %197 = vector.multi_reduction <add>, %196, %cst_68 [1] : vector<16x32xf32> to vector<16xf32>
    %198 = vector.shape_cast %197 : vector<16xf32> to vector<16x1xf32>
    %cst_69 = arith.constant 3.200000e+01 : f32
    %199 = vector.broadcast %cst_69 : f32 to vector<16x1xf32>
    %200 = arith.divf %198, %199 : vector<16x1xf32>
    %201 = vector.broadcast %200 : vector<16x1xf32> to vector<16x32xf32>
    %202 = arith.subf %196, %201 : vector<16x32xf32>
    %203 = arith.mulf %202, %202 : vector<16x32xf32>
    %cst_70 = arith.constant dense<0.000000e+00> : vector<16xf32>
    %204 = vector.multi_reduction <add>, %203, %cst_70 [1] : vector<16x32xf32> to vector<16xf32>
    %205 = vector.shape_cast %204 : vector<16xf32> to vector<16x1xf32>
    %cst_71 = arith.constant 3.200000e+01 : f32
    %206 = vector.broadcast %cst_71 : f32 to vector<16x1xf32>
    %207 = arith.divf %205, %206 : vector<16x1xf32>
    %208 = vector.broadcast %200 : vector<16x1xf32> to vector<16x32xf32>
    %209 = arith.subf %196, %208 : vector<16x32xf32>
    %cst_72 = arith.constant 9.99999974E-6 : f32
    %210 = vector.broadcast %cst_72 : f32 to vector<16x1xf32>
    %211 = arith.addf %207, %210 : vector<16x1xf32>
    %212 = math.rsqrt %211 : vector<16x1xf32>
    %213 = vector.broadcast %212 : vector<16x1xf32> to vector<16x32xf32>
    %214 = arith.mulf %209, %213 : vector<16x32xf32>
    %215 = vector.broadcast %154 : vector<1x32xf32> to vector<16x32xf32>
    %216 = arith.mulf %214, %215 : vector<16x32xf32>
    %217 = vector.broadcast %155 : vector<1x32xf32> to vector<16x32xf32>
    %218 = arith.addf %216, %217 : vector<16x32xf32>
    %c0_73 = arith.constant 0 : index
    %c0_74 = arith.constant 0 : index
    %219 = vector.load %arg12[%c0_73, %c0_74] : memref<16x32xf32, #tpu.memory_space<vmem>>, vector<16x32xf32>
    tpu.vector_store %arg12[%c0_73, %c0_74], %218 {strides = array<i32>} : memref<16x32xf32, #tpu.memory_space<vmem>>, vector<16x32xf32>,
    return
  }
  func.func @transform_0(%arg0: i32) -> (i32, i32) {
    %c0_i32 = arith.constant 0 : i32
    %c0_i32_0 = arith.constant 0 : i32
    return %arg0, %c0_i32 : i32, i32
  }
  func.func @transform_1(%arg0: i32) -> (i32, i32) {
    %c0_i32 = arith.constant 0 : i32
    %c0_i32_0 = arith.constant 0 : i32
    %c0_i32_1 = arith.constant 0 : i32
    return %c0_i32, %c0_i32_0 : i32, i32
  }
  func.func @transform_2(%arg0: i32) -> (i32, i32) {
    %c0_i32 = arith.constant 0 : i32
    %c0_i32_0 = arith.constant 0 : i32
    %c0_i32_1 = arith.constant 0 : i32
    return %c0_i32, %c0_i32_0 : i32, i32
  }
  func.func @transform_3(%arg0: i32) -> (i32, i32) {
    %c0_i32 = arith.constant 0 : i32
    %c0_i32_0 = arith.constant 0 : i32
    %c0_i32_1 = arith.constant 0 : i32
    return %c0_i32, %c0_i32_0 : i32, i32
  }
  func.func @transform_4(%arg0: i32) -> (i32, i32) {
    %c0_i32 = arith.constant 0 : i32
    %c0_i32_0 = arith.constant 0 : i32
    %c0_i32_1 = arith.constant 0 : i32
    return %c0_i32, %c0_i32_0 : i32, i32
  }
  func.func @transform_5(%arg0: i32) -> (i32, i32) {
    %c0_i32 = arith.constant 0 : i32
    %c0_i32_0 = arith.constant 0 : i32
    %c0_i32_1 = arith.constant 0 : i32
    return %c0_i32, %c0_i32_0 : i32, i32
  }
  func.func @transform_6(%arg0: i32) -> (i32, i32) {
    %c0_i32 = arith.constant 0 : i32
    %c0_i32_0 = arith.constant 0 : i32
    %c0_i32_1 = arith.constant 0 : i32
    return %c0_i32, %c0_i32_0 : i32, i32
  }
  func.func @transform_7(%arg0: i32) -> (i32, i32) {
    %c0_i32 = arith.constant 0 : i32
    %c0_i32_0 = arith.constant 0 : i32
    %c0_i32_1 = arith.constant 0 : i32
    return %c0_i32, %c0_i32_0 : i32, i32
  }
  func.func @transform_8(%arg0: i32) -> (i32, i32) {
    %c0_i32 = arith.constant 0 : i32
    %c0_i32_0 = arith.constant 0 : i32
    %c0_i32_1 = arith.constant 0 : i32
    return %c0_i32, %c0_i32_0 : i32, i32
  }
  func.func @transform_9(%arg0: i32) -> (i32, i32) {
    %c0_i32 = arith.constant 0 : i32
    %c0_i32_0 = arith.constant 0 : i32
    %c0_i32_1 = arith.constant 0 : i32
    return %c0_i32, %c0_i32_0 : i32, i32
  }
  func.func @transform_10(%arg0: i32) -> (i32, i32) {
    %c0_i32 = arith.constant 0 : i32
    %c0_i32_0 = arith.constant 0 : i32
    %c0_i32_1 = arith.constant 0 : i32
    return %c0_i32, %c0_i32_0 : i32, i32
  }
  func.func @transform_11(%arg0: i32) -> (i32, i32) {
    %c0_i32 = arith.constant 0 : i32
    %c0_i32_0 = arith.constant 0 : i32
    return %arg0, %c0_i32 : i32, i32
  }
}

</mosaic_0001>

<llo_original>
// kernel: tpu_custom_call.1
$region0: #{tpu_custom_call.1}
  #allocation0 [shape = 'u32[]', space=smem, size = 0x4, offset = 0x4, fixed_abs, tag = 'smem constant byte address 0x4 - core index']
  #allocation1 [shape = 'u32[144,128]{1,0:T(1,128)}', space=vmem, size = 0x12000, scoped, tag = 'internal scratch']
  #allocation2 [shape = 'f32[1,1]{1,0:T(1,128)S(1)}', space=vmem, size = 0x200, scoped, tag = 'scoped memory for tpu_custom_call.1']
  %s0 = inlined_call_operand.vmem [shape: f32[16,32], index: 0, kind: input, shape index: {}]
  %s1 = inlined_call_operand.vmem [shape: f32[8,8], index: 1, kind: input, shape index: {}]
  %s2 = inlined_call_operand.vmem [shape: bf16[32,96], index: 2, kind: input, shape index: {}]
  %s3 = inlined_call_operand.vmem [shape: bf16[32,32], index: 3, kind: input, shape index: {}]
  %s4 = inlined_call_operand.vmem [shape: f32[1,32], index: 4, kind: input, shape index: {}]
  %s5 = inlined_call_operand.vmem [shape: f32[1,32], index: 5, kind: input, shape index: {}]
  %s6 = inlined_call_operand.vmem [shape: bf16[32,128], index: 6, kind: input, shape index: {}]
  %s7 = inlined_call_operand.vmem [shape: f32[1,128], index: 7, kind: input, shape index: {}]
  %s8 = inlined_call_operand.<no memory space> [shape: f32[1,1], index: 8, kind: input, shape index: {}]
  %s9 = inlined_call_operand.vmem [shape: bf16[128,32], index: 9, kind: input, shape index: {}]
  %s10 = inlined_call_operand.vmem [shape: f32[1,32], index: 10, kind: input, shape index: {}]
  %s11 = inlined_call_operand.hbm [shape: f32[16,32], index: 11, kind: output, shape index: {}]
  %s12 = sld [smem:[#allocation0]]
  $region54: #{tpu_custom_call.1} parent=0
    _
  %s14 = ssub.s32 1, %s12
  %s15 = scalar_select 0, %s14, %s12
  %v16 = vstv %s8
  %17 = vst [vmem:[#allocation2] sm:$0x1] %v16
  $region1: #{tpu_custom_call.1} parent=0
    #allocation3 [shape = 'u8[8192]{0}', space=vmem, size = 0x2000, scoped, tag = 'output window, operand 0, single buffered']
    #allocation4 [shape = 's32[1]{0}', space=sflag, size = 0x4, scoped, tag = 'scoped memory for tpu_custom_call.1']
    %18 = vsyncpa [#allocation4], 0
    // Predicated region
    $region2: #{tpu_custom_call.1} parent=1 // pred_check
      _
    $region3: #{tpu_custom_call.1} parent=1 // pred_check_branch
      %20 = sbr.rel (0) target = $region5
    $region4: #{tpu_custom_call.1} parent=1 // pred_region
      _
    $region5: #{tpu_custom_call.1} parent=1 // pred_fallthru
      _
    // Predicated region
    $region6: #{tpu_custom_call.1} parent=1 // pred_check
      _
    $region7: #{tpu_custom_call.1} parent=1 // pred_check_branch
      %22 = sbr.rel (0) target = $region9
    $region8: #{tpu_custom_call.1} parent=1 // pred_region
      _
    $region9: #{tpu_custom_call.1} parent=1 // pred_fallthru
      _
    // Predicated region
    $region10: #{tpu_custom_call.1} parent=1 // pred_check
      _
    $region11: #{tpu_custom_call.1} parent=1 // pred_check_branch
      %24 = sbr.rel (0) target = $region13
    $region12: #{tpu_custom_call.1} parent=1 // pred_region
      _
    $region13: #{tpu_custom_call.1} parent=1 // pred_fallthru
      _
    // Predicated region
    $region14: #{tpu_custom_call.1} parent=1 // pred_check
      _
    $region15: #{tpu_custom_call.1} parent=1 // pred_check_branch
      %26 = sbr.rel (0) target = $region17
    $region16: #{tpu_custom_call.1} parent=1 // pred_region
      _
    $region17: #{tpu_custom_call.1} parent=1 // pred_fallthru
      _
    // Predicated region
    $region18: #{tpu_custom_call.1} parent=1 // pred_check
      _
    $region19: #{tpu_custom_call.1} parent=1 // pred_check_branch
      %28 = sbr.rel (0) target = $region21
    $region20: #{tpu_custom_call.1} parent=1 // pred_region
      _
    $region21: #{tpu_custom_call.1} parent=1 // pred_fallthru
      _
    // Predicated region
    $region22: #{tpu_custom_call.1} parent=1 // pred_check
      _
    $region23: #{tpu_custom_call.1} parent=1 // pred_check_branch
      %30 = sbr.rel (0) target = $region25
    $region24: #{tpu_custom_call.1} parent=1 // pred_region
      _
    $region25: #{tpu_custom_call.1} parent=1 // pred_fallthru
      _
    // Predicated region
    $region26: #{tpu_custom_call.1} parent=1 // pred_check
      _
    $region27: #{tpu_custom_call.1} parent=1 // pred_check_branch
      %32 = sbr.rel (0) target = $region29
    $region28: #{tpu_custom_call.1} parent=1 // pred_region
      _
    $region29: #{tpu_custom_call.1} parent=1 // pred_fallthru
      _
    // Predicated region
    $region30: #{tpu_custom_call.1} parent=1 // pred_check
      _
    $region31: #{tpu_custom_call.1} parent=1 // pred_check_branch
      %34 = sbr.rel (0) target = $region33
    $region32: #{tpu_custom_call.1} parent=1 // pred_region
      _
    $region33: #{tpu_custom_call.1} parent=1 // pred_fallthru
      _
    // Predicated region
    $region34: #{tpu_custom_call.1} parent=1 // pred_check
      _
    $region35: #{tpu_custom_call.1} parent=1 // pred_check_branch
      %36 = sbr.rel (0) target = $region37
    $region36: #{tpu_custom_call.1} parent=1 // pred_region
      _
    $region37: #{tpu_custom_call.1} parent=1 // pred_fallthru
      _
    // Predicated region
    $region38: #{tpu_custom_call.1} parent=1 // pred_check
      _
    $region39: #{tpu_custom_call.1} parent=1 // pred_check_branch
      %38 = sbr.rel (0) target = $region41
    $region40: #{tpu_custom_call.1} parent=1 // pred_region
      _
    $region41: #{tpu_custom_call.1} parent=1 // pred_fallthru
      _
    // Predicated region
    $region42: #{tpu_custom_call.1} parent=1 // pred_check
      _
    $region43: #{tpu_custom_call.1} parent=1 // pred_check_branch
      %40 = sbr.rel (0) target = $region45
    $region44: #{tpu_custom_call.1} parent=1 // pred_region
      _
    $region45: #{tpu_custom_call.1} parent=1 // pred_fallthru
      _
    %v42 = vld [vmem:[%s0] sm:$0xff]
    %v43 = vld [vmem:[%s0 + $0x8] sm:$0xff]
    %v44 = vld [vmem:[%s1] sm:$0xff]
    %v45 = vpack.c.bf16 %v43, %v42
    %v46 = vld [vmem:[%s2] sm:$0xf]
    %v47 = vld [vmem:[%s2 + $0x4] sm:$0xf]
    %v48 = vld [vmem:[%s2 + $0x8] sm:$0xf]
    %v49 = vld [vmem:[%s2 + $0xc] sm:$0xf]
    %v54 = vunpack.c.l.b16 %v46
    %v55 = vunpack.c.l.b16 %v47
    %v56 = vunpack.c.l.b16 %v48
    %v57 = vunpack.c.l.b16 %v49
    %v58 = vpack.c.b16 %v55, %v54
    %v59 = vpack.c.b16 %v57, %v56
    %vm62 = vcmask 261120
    %v64 = vsel %vm62, %v45, 0
    %66 = vmatprep.subr.bf16.mxu0 0
    %67 = vmatpush1.bf16.msra.mxu0 %v58
    %68 = vmatprep.subr.bf16.mxu0 0
    %69 = vmatpush1.bf16.msra.mxu0 %v59
    %70 = vmatprep.subr.bf16.mxu0 0
    %71 = vmatpush1.bf16.msra.mxu0 0
    %72 = vmatprep.subr.bf16.mxu0 0
    %73 = vmatpush1.bf16.msra.mxu0 0
    %74 = vmatprep.subr.bf16.mxu0 0
    %75 = vmatpush1.bf16.msra.mxu0 0
    %76 = vmatprep.subr.bf16.mxu0 0
    %77 = vmatpush1.bf16.msra.mxu0 0
    %78 = vmatprep.subr.bf16.mxu0 0
    %79 = vmatpush1.bf16.msra.mxu0 0
    %80 = vmatprep.subr.bf16.mxu0 0
    %81 = vmatpush1.bf16.msra.mxu0 0
    %82 = vmatprep.subr.bf16.mxu0 0
    %83 = vmatpush1.bf16.msra.mxu0 0
    %84 = vmatprep.subr.bf16.mxu0 0
    %85 = vmatpush1.bf16.msra.mxu0 0
    %86 = vmatprep.subr.bf16.mxu0 0
    %87 = vmatpush1.bf16.msra.mxu0 0
    %88 = vmatprep.subr.bf16.mxu0 0
    %89 = vmatpush1.bf16.msra.mxu0 0
    %90 = vmatprep.subr.bf16.mxu0 0
    %91 = vmatpush1.bf16.msra.mxu0 0
    %92 = vmatprep.subr.bf16.mxu0 0
    %93 = vmatpush1.bf16.msra.mxu0 0
    %94 = vmatprep.subr.bf16.mxu0 0
    %95 = vmatpush1.bf16.msra.mxu0 0
    %96 = vmatprep.subr.bf16.mxu0 0
    %97 = vmatpush1.bf16.msra.mxu0 0
    %98 = vmatprep.mubr.bf16.mxu0 0
    %99 = vmatmul.mubr.bf16.gmra.mrb[0].mxu0 %v64
    %v100 = vpop.f32.mrb[0].mxu0
    %v101 = vadd.f32 0.0, %v100
    %v102 = vpop.f32.mrb[0].mxu0
    %v103 = vpop.f32.mrb[0].mxu0
    %v104 = vadd.f32 0.0, %v103
    %v105 = vpop.f32.mrb[0].mxu0
    %106 = vdwg.mxu0
    %v107 = vmul.f32 %v101, 0.17677669
    %v108 = vmul.f32 %v104, 0.17677669
    %v109 = vpack.c.bf16 %v108, %v107
    %v110 = vpack.c.bf16 %v104, %v101
    %v112 = vunpack.c.l.b16 %v109
    %v113 = vunpack.c.h.b16 %v109
    %v114 = vpack.c.b16 %v112, %v112
    %v115 = vpack.c.b16 %v113, %v113
    %v117 = vunpack.c.l.b16 %v110
    %v118 = vunpack.c.h.b16 %v110
    %v119 = vpack.c.b16 %v117, %v117
    %120 = vrot.lane.b32.xlu0 %v119, 96
    %v121 = vpop.permute.xlu0 %120
    %vm122 = vcmask 64512
    %v124 = vsel %vm122, %v114, 0
    %v127 = vsel %vm122, %v121, 0
    %129 = vmatprep.subr.bf16.mxu0 0
    %130 = vmatpush1.bf16.xpose.msra.mxu0 %v127
    %131 = vmatprep.subr.bf16.mxu0 0
    %132 = vmatpush1.bf16.xpose.msra.mxu0 0
    %133 = vmatprep.subr.bf16.mxu0 0
    %134 = vmatpush1.bf16.xpose.msra.mxu0 0
    %135 = vmatprep.subr.bf16.mxu0 0
    %136 = vmatpush1.bf16.xpose.msra.mxu0 0
    %137 = vmatprep.subr.bf16.mxu0 0
    %138 = vmatpush1.bf16.xpose.msra.mxu0 0
    %139 = vmatprep.subr.bf16.mxu0 0
    %140 = vmatpush1.bf16.xpose.msra.mxu0 0
    %141 = vmatprep.subr.bf16.mxu0 0
    %142 = vmatpush1.bf16.xpose.msra.mxu0 0
    %143 = vmatprep.subr.bf16.mxu0 0
    %144 = vmatpush1.bf16.xpose.msra.mxu0 0
    %145 = vmatprep.subr.bf16.mxu0 0
    %146 = vmatpush1.bf16.xpose.msra.mxu0 0
    %147 = vmatprep.subr.bf16.mxu0 0
    %148 = vmatpush1.bf16.xpose.msra.mxu0 0
    %149 = vmatprep.subr.bf16.mxu0 0
    %150 = vmatpush1.bf16.xpose.msra.mxu0 0
    %151 = vmatprep.subr.bf16.mxu0 0
    %152 = vmatpush1.bf16.xpose.msra.mxu0 0
    %153 = vmatprep.subr.bf16.mxu0 0
    %154 = vmatpush1.bf16.xpose.msra.mxu0 0
    %155 = vmatprep.subr.bf16.mxu0 0
    %156 = vmatpush1.bf16.xpose.msra.mxu0 0
    %157 = vmatprep.subr.bf16.mxu0 0
    %158 = vmatpush1.bf16.xpose.msra.mxu0 0
    %159 = vmatprep.subr.bf16.mxu0 0
    %160 = vmatpush1.bf16.xpose.msra.mxu0 0
    %161 = vmatprep.mubr.bf16.mxu0 0
    %162 = vmatmul.mubr.bf16.gmra.mrb[0].mxu0 %v124
    %v163 = vpop.f32.mrb[0].mxu0
    %v164 = vadd.f32 %v44, %v163
    %v165 = vpop.f32.mrb[0].mxu0
    %v166 = vpop.f32.mrb[0].mxu0
    %v167 = vpop.f32.mrb[0].mxu0
    %168 = vdwg.mxu0
    %v169 = vpack.c.b16 %v118, %v118
    %170 = vrot.lane.b32.xlu0 %v169, 96
    %v171 = vpop.permute.xlu0 %170
    %v173 = vsel %vm122, %v115, 0
    %v176 = vsel %vm122, %v171, 0
    %178 = vmatprep.subr.bf16.mxu0 0
    %179 = vmatpush1.bf16.xpose.msra.mxu0 %v176
    %180 = vmatprep.subr.bf16.mxu0 0
    %181 = vmatpush1.bf16.xpose.msra.mxu0 0
    %182 = vmatprep.subr.bf16.mxu0 0
    %183 = vmatpush1.bf16.xpose.msra.mxu0 0
    %184 = vmatprep.subr.bf16.mxu0 0
    %185 = vmatpush1.bf16.xpose.msra.mxu0 0
    %186 = vmatprep.subr.bf16.mxu0 0
    %187 = vmatpush1.bf16.xpose.msra.mxu0 0
    %188 = vmatprep.subr.bf16.mxu0 0
    %189 = vmatpush1.bf16.xpose.msra.mxu0 0
    %190 = vmatprep.subr.bf16.mxu0 0
    %191 = vmatpush1.bf16.xpose.msra.mxu0 0
    %192 = vmatprep.subr.bf16.mxu0 0
    %193 = vmatpush1.bf16.xpose.msra.mxu0 0
    %194 = vmatprep.subr.bf16.mxu0 0
    %195 = vmatpush1.bf16.xpose.msra.mxu0 0
    %196 = vmatprep.subr.bf16.mxu0 0
    %197 = vmatpush1.bf16.xpose.msra.mxu0 0
    %198 = vmatprep.subr.bf16.mxu0 0
    %199 = vmatpush1.bf16.xpose.msra.mxu0 0
    %200 = vmatprep.subr.bf16.mxu0 0
    %201 = vmatpush1.bf16.xpose.msra.mxu0 0
    %202 = vmatprep.subr.bf16.mxu0 0
    %203 = vmatpush1.bf16.xpose.msra.mxu0 0
    %204 = vmatprep.subr.bf16.mxu0 0
    %205 = vmatpush1.bf16.xpose.msra.mxu0 0
    %206 = vmatprep.subr.bf16.mxu0 0
    %207 = vmatpush1.bf16.xpose.msra.mxu0 0
    %208 = vmatprep.subr.bf16.mxu0 0
    %209 = vmatpush1.bf16.xpose.msra.mxu0 0
    %210 = vmatprep.mubr.bf16.mxu0 0
    %211 = vmatmul.mubr.bf16.gmra.mrb[0].mxu0 %v173
    %v212 = vpop.f32.mrb[0].mxu0
    %v213 = vadd.f32 %v44, %v212
    %v214 = vpop.f32.mrb[0].mxu0
    %v215 = vpop.f32.mrb[0].mxu0
    %v216 = vpop.f32.mrb[0].mxu0
    %217 = vdwg.mxu0
    %v218 = vsel %vm122, %v164, -inf
    %219 = vmax.xlane.f32.xlu0 %v218
    %v220 = vpop.xlane.xlu0 %219
    %v221 = vsel %vm122, %v213, -inf
    %222 = vmax.xlane.f32.xlu0 %v221
    %v223 = vpop.xlane.xlu0 %222
    %v224 = vmax.f32 %v220, -1e+30
    %v225 = vmax.f32 %v223, -1e+30
    %v226 = vsub.f32 %v164, %v224
    %v227 = vsub.f32 %v213, %v225
    %v228 = vmul.f32 %v226, 1.442695
    %v229 = vpow.pop %v228
    %v230 = vmul.f32 %v227, 1.442695
    %v231 = vpow.pop %v230
    %v232 = vsel %vm122, %v229, 0.0
    %233 = vadd.xlane.f32.xlu0 %v232
    %v234 = vpop.xlane.xlu0 %233
    %v235 = vsel %vm122, %v231, 0.0
    %236 = vadd.xlane.f32.xlu0 %v235
    %v237 = vpop.xlane.xlu0 %236
    %vm238 = vcmp.eq.f32.partialorder %v234, 0.0
    %vm239 = vcmp.eq.f32.partialorder %v237, 0.0
    %v240 = vsel %vm238, 1.0, %v234
    %v241 = vsel %vm239, 1.0, %v237
    %v242 = vrcp.pop %v240
    %v243 = vrcp.pop %v241
    %v244 = vmul.f32 %v229, %v242
    %v245 = vmul.f32 %v231, %v243
    %v246 = vpack.c.bf16 %v244, %v244
    %v247 = vpack.c.bf16 %v245, %v245
    %248 = vrot.lane.b32.xlu0 %v119, 64
    %v249 = vpop.permute.xlu0 %248
    %v251 = vsel %vm122, %v246, 0
    %vm253 = vcmask 1043456
    %v255 = vsel %vm253, %v249, 0
    %257 = vmatprep.subr.bf16.mxu0 0
    %258 = vmatpush1.bf16.msra.mxu0 %v255
    %259 = vmatprep.subr.bf16.mxu0 0
    %260 = vmatpush1.bf16.msra.mxu0 0
    %261 = vmatprep.subr.bf16.mxu0 0
    %262 = vmatpush1.bf16.msra.mxu0 0
    %263 = vmatprep.subr.bf16.mxu0 0
    %264 = vmatpush1.bf16.msra.mxu0 0
    %265 = vmatprep.subr.bf16.mxu0 0
    %266 = vmatpush1.bf16.msra.mxu0 0
    %267 = vmatprep.subr.bf16.mxu0 0
    %268 = vmatpush1.bf16.msra.mxu0 0
    %269 = vmatprep.subr.bf16.mxu0 0
    %270 = vmatpush1.bf16.msra.mxu0 0
    %271 = vmatprep.subr.bf16.mxu0 0
    %272 = vmatpush1.bf16.msra.mxu0 0
    %273 = vmatprep.subr.bf16.mxu0 0
    %274 = vmatpush1.bf16.msra.mxu0 0
    %275 = vmatprep.subr.bf16.mxu0 0
    %276 = vmatpush1.bf16.msra.mxu0 0
    %277 = vmatprep.subr.bf16.mxu0 0
    %278 = vmatpush1.bf16.msra.mxu0 0
    %279 = vmatprep.subr.bf16.mxu0 0
    %280 = vmatpush1.bf16.msra.mxu0 0
    %281 = vmatprep.subr.bf16.mxu0 0
    %282 = vmatpush1.bf16.msra.mxu0 0
    %283 = vmatprep.subr.bf16.mxu0 0
    %284 = vmatpush1.bf16.msra.mxu0 0
    %285 = vmatprep.subr.bf16.mxu0 0
    %286 = vmatpush1.bf16.msra.mxu0 0
    %287 = vmatprep.subr.bf16.mxu0 0
    %288 = vmatpush1.bf16.msra.mxu0 0
    %289 = vmatprep.mubr.bf16.mxu0 0
    %290 = vmatmul.mubr.bf16.gmra.mrb[0].mxu0 %v251
    %v291 = vpop.f32.mrb[0].mxu0
    %v292 = vadd.f32 0.0, %v291
    %v293 = vpop.f32.mrb[0].mxu0
    %v294 = vpop.f32.mrb[0].mxu0
    %v295 = vpop.f32.mrb[0].mxu0
    %296 = vdwg.mxu0
    %297 = vrot.lane.b32.xlu0 %v169, 64
    %v298 = vpop.permute.xlu0 %297
    %v300 = vsel %vm122, %v247, 0
    %v303 = vsel %vm253, %v298, 0
    %305 = vmatprep.subr.bf16.mxu0 0
    %306 = vmatpush1.bf16.msra.mxu0 %v303
    %307 = vmatprep.subr.bf16.mxu0 0
    %308 = vmatpush1.bf16.msra.mxu0 0
    %309 = vmatprep.subr.bf16.mxu0 0
    %310 = vmatpush1.bf16.msra.mxu0 0
    %311 = vmatprep.subr.bf16.mxu0 0
    %312 = vmatpush1.bf16.msra.mxu0 0
    %313 = vmatprep.subr.bf16.mxu0 0
    %314 = vmatpush1.bf16.msra.mxu0 0
    %315 = vmatprep.subr.bf16.mxu0 0
    %316 = vmatpush1.bf16.msra.mxu0 0
    %317 = vmatprep.subr.bf16.mxu0 0
    %318 = vmatpush1.bf16.msra.mxu0 0
    %319 = vmatprep.subr.bf16.mxu0 0
    %320 = vmatpush1.bf16.msra.mxu0 0
    %321 = vmatprep.subr.bf16.mxu0 0
    %322 = vmatpush1.bf16.msra.mxu0 0
    %323 = vmatprep.subr.bf16.mxu0 0
    %324 = vmatpush1.bf16.msra.mxu0 0
    %325 = vmatprep.subr.bf16.mxu0 0
    %326 = vmatpush1.bf16.msra.mxu0 0
    %327 = vmatprep.subr.bf16.mxu0 0
    %328 = vmatpush1.bf16.msra.mxu0 0
    %329 = vmatprep.subr.bf16.mxu0 0
    %330 = vmatpush1.bf16.msra.mxu0 0
    %331 = vmatprep.subr.bf16.mxu0 0
    %332 = vmatpush1.bf16.msra.mxu0 0
    %333 = vmatprep.subr.bf16.mxu0 0
    %334 = vmatpush1.bf16.msra.mxu0 0
    %335 = vmatprep.subr.bf16.mxu0 0
    %336 = vmatpush1.bf16.msra.mxu0 0
    %337 = vmatprep.mubr.bf16.mxu0 0
    %338 = vmatmul.mubr.bf16.gmra.mrb[0].mxu0 %v300
    %v339 = vpop.f32.mrb[0].mxu0
    %v340 = vadd.f32 0.0, %v339
    %v341 = vpop.f32.mrb[0].mxu0
    %v342 = vpop.f32.mrb[0].mxu0
    %v343 = vpop.f32.mrb[0].mxu0
    %344 = vdwg.mxu0
    %v345 = vpack.c.bf16 %v340, %v292
    %v346 = vld [vmem:[%s3] sm:$0xf]
    %v348 = vsel %vm122, %v345, 0
    %v351 = vsel %vm253, %v346, 0
    %353 = vmatprep.subr.bf16.mxu0 0
    %354 = vmatpush1.bf16.msra.mxu0 %v351
    %355 = vmatprep.subr.bf16.mxu0 0
    %356 = vmatpush1.bf16.msra.mxu0 0
    %357 = vmatprep.subr.bf16.mxu0 0
    %358 = vmatpush1.bf16.msra.mxu0 0
    %359 = vmatprep.subr.bf16.mxu0 0
    %360 = vmatpush1.bf16.msra.mxu0 0
    %361 = vmatprep.subr.bf16.mxu0 0
    %362 = vmatpush1.bf16.msra.mxu0 0
    %363 = vmatprep.subr.bf16.mxu0 0
    %364 = vmatpush1.bf16.msra.mxu0 0
    %365 = vmatprep.subr.bf16.mxu0 0
    %366 = vmatpush1.bf16.msra.mxu0 0
    %367 = vmatprep.subr.bf16.mxu0 0
    %368 = vmatpush1.bf16.msra.mxu0 0
    %369 = vmatprep.subr.bf16.mxu0 0
    %370 = vmatpush1.bf16.msra.mxu0 0
    %371 = vmatprep.subr.bf16.mxu0 0
    %372 = vmatpush1.bf16.msra.mxu0 0
    %373 = vmatprep.subr.bf16.mxu0 0
    %374 = vmatpush1.bf16.msra.mxu0 0
    %375 = vmatprep.subr.bf16.mxu0 0
    %376 = vmatpush1.bf16.msra.mxu0 0
    %377 = vmatprep.subr.bf16.mxu0 0
    %378 = vmatpush1.bf16.msra.mxu0 0
    %379 = vmatprep.subr.bf16.mxu0 0
    %380 = vmatpush1.bf16.msra.mxu0 0
    %381 = vmatprep.subr.bf16.mxu0 0
    %382 = vmatpush1.bf16.msra.mxu0 0
    %383 = vmatprep.subr.bf16.mxu0 0
    %384 = vmatpush1.bf16.msra.mxu0 0
    %385 = vmatprep.mubr.bf16.mxu0 0
    %386 = vmatmul.mubr.bf16.gmra.mrb[0].mxu0 %v348
    %v387 = vpop.f32.mrb[0].mxu0
    %v388 = vadd.f32 0.0, %v387
    %v389 = vpop.f32.mrb[0].mxu0
    %v390 = vpop.f32.mrb[0].mxu0
    %v391 = vadd.f32 0.0, %v390
    %v392 = vpop.f32.mrb[0].mxu0
    %393 = vdwg.mxu0
    %v394 = vadd.f32 %v42, %v388
    %v395 = vadd.f32 %v43, %v391
    %396 = vrot.lane.b32.xlu0 %v114, 120
    %v397 = vpop.permute.xlu0 %396
    %398 = vrot.lane.b32.xlu0 %v119, 88
    %v399 = vpop.permute.xlu0 %398
    %v401 = vsel %vm122, %v397, 0
    %v404 = vsel %vm122, %v399, 0
    %406 = vmatprep.subr.bf16.mxu0 0
    %407 = vmatpush1.bf16.xpose.msra.mxu0 %v404
    %408 = vmatprep.subr.bf16.mxu0 0
    %409 = vmatpush1.bf16.xpose.msra.mxu0 0
    %410 = vmatprep.subr.bf16.mxu0 0
    %411 = vmatpush1.bf16.xpose.msra.mxu0 0
    %412 = vmatprep.subr.bf16.mxu0 0
    %413 = vmatpush1.bf16.xpose.msra.mxu0 0
    %414 = vmatprep.subr.bf16.mxu0 0
    %415 = vmatpush1.bf16.xpose.msra.mxu0 0
    %416 = vmatprep.subr.bf16.mxu0 0
    %417 = vmatpush1.bf16.xpose.msra.mxu0 0
    %418 = vmatprep.subr.bf16.mxu0 0
    %419 = vmatpush1.bf16.xpose.msra.mxu0 0
    %420 = vmatprep.subr.bf16.mxu0 0
    %421 = vmatpush1.bf16.xpose.msra.mxu0 0
    %422 = vmatprep.subr.bf16.mxu0 0
    %423 = vmatpush1.bf16.xpose.msra.mxu0 0
    %424 = vmatprep.subr.bf16.mxu0 0
    %425 = vmatpush1.bf16.xpose.msra.mxu0 0
    %426 = vmatprep.subr.bf16.mxu0 0
    %427 = vmatpush1.bf16.xpose.msra.mxu0 0
    %428 = vmatprep.subr.bf16.mxu0 0
    %429 = vmatpush1.bf16.xpose.msra.mxu0 0
    %430 = vmatprep.subr.bf16.mxu0 0
    %431 = vmatpush1.bf16.xpose.msra.mxu0 0
    %432 = vmatprep.subr.bf16.mxu0 0
    %433 = vmatpush1.bf16.xpose.msra.mxu0 0
    %434 = vmatprep.subr.bf16.mxu0 0
    %435 = vmatpush1.bf16.xpose.msra.mxu0 0
    %436 = vmatprep.subr.bf16.mxu0 0
    %437 = vmatpush1.bf16.xpose.msra.mxu0 0
    %438 = vmatprep.mubr.bf16.mxu0 0
    %439 = vmatmul.mubr.bf16.gmra.mrb[0].mxu0 %v401
    %v440 = vpop.f32.mrb[0].mxu0
    %v441 = vadd.f32 %v44, %v440
    %v442 = vpop.f32.mrb[0].mxu0
    %v443 = vpop.f32.mrb[0].mxu0
    %v444 = vpop.f32.mrb[0].mxu0
    %445 = vdwg.mxu0
    %446 = vrot.lane.b32.xlu0 %v115, 120
    %v447 = vpop.permute.xlu0 %446
    %448 = vrot.lane.b32.xlu0 %v169, 88
    %v449 = vpop.permute.xlu0 %448
    %v451 = vsel %vm122, %v447, 0
    %v454 = vsel %vm122, %v449, 0
    %456 = vmatprep.subr.bf16.mxu0 0
    %457 = vmatpush1.bf16.xpose.msra.mxu0 %v454
    %458 = vmatprep.subr.bf16.mxu0 0
    %459 = vmatpush1.bf16.xpose.msra.mxu0 0
    %460 = vmatprep.subr.bf16.mxu0 0
    %461 = vmatpush1.bf16.xpose.msra.mxu0 0
    %462 = vmatprep.subr.bf16.mxu0 0
    %463 = vmatpush1.bf16.xpose.msra.mxu0 0
    %464 = vmatprep.subr.bf16.mxu0 0
    %465 = vmatpush1.bf16.xpose.msra.mxu0 0
    %466 = vmatprep.subr.bf16.mxu0 0
    %467 = vmatpush1.bf16.xpose.msra.mxu0 0
    %468 = vmatprep.subr.bf16.mxu0 0
    %469 = vmatpush1.bf16.xpose.msra.mxu0 0
    %470 = vmatprep.subr.bf16.mxu0 0
    %471 = vmatpush1.bf16.xpose.msra.mxu0 0
    %472 = vmatprep.subr.bf16.mxu0 0
    %473 = vmatpush1.bf16.xpose.msra.mxu0 0
    %474 = vmatprep.subr.bf16.mxu0 0
    %475 = vmatpush1.bf16.xpose.msra.mxu0 0
    %476 = vmatprep.subr.bf16.mxu0 0
    %477 = vmatpush1.bf16.xpose.msra.mxu0 0
    %478 = vmatprep.subr.bf16.mxu0 0
    %479 = vmatpush1.bf16.xpose.msra.mxu0 0
    %480 = vmatprep.subr.bf16.mxu0 0
    %481 = vmatpush1.bf16.xpose.msra.mxu0 0
    %482 = vmatprep.subr.bf16.mxu0 0
    %483 = vmatpush1.bf16.xpose.msra.mxu0 0
    %484 = vmatprep.subr.bf16.mxu0 0
    %485 = vmatpush1.bf16.xpose.msra.mxu0 0
    %486 = vmatprep.subr.bf16.mxu0 0
    %487 = vmatpush1.bf16.xpose.msra.mxu0 0
    %488 = vmatprep.mubr.bf16.mxu0 0
    %489 = vmatmul.mubr.bf16.gmra.mrb[0].mxu0 %v451
    %v490 = vpop.f32.mrb[0].mxu0
    %v491 = vadd.f32 %v44, %v490
    %v492 = vpop.f32.mrb[0].mxu0
    %v493 = vpop.f32.mrb[0].mxu0
    %v494 = vpop.f32.mrb[0].mxu0
    %495 = vdwg.mxu0
    %v496 = vsel %vm122, %v441, -inf
    %497 = vmax.xlane.f32.xlu0 %v496
    %v498 = vpop.xlane.xlu0 %497
    %v499 = vsel %vm122, %v491, -inf
    %500 = vmax.xlane.f32.xlu0 %v499
    %v501 = vpop.xlane.xlu0 %500
    %v502 = vmax.f32 %v498, -1e+30
    %v503 = vmax.f32 %v501, -1e+30
    %v504 = vsub.f32 %v441, %v502
    %v505 = vsub.f32 %v491, %v503
    %v506 = vmul.f32 %v504, 1.442695
    %v507 = vpow.pop %v506
    %v508 = vmul.f32 %v505, 1.442695
    %v509 = vpow.pop %v508
    %v510 = vsel %vm122, %v507, 0.0
    %511 = vadd.xlane.f32.xlu0 %v510
    %v512 = vpop.xlane.xlu0 %511
    %v513 = vsel %vm122, %v509, 0.0
    %514 = vadd.xlane.f32.xlu0 %v513
    %v515 = vpop.xlane.xlu0 %514
    %vm516 = vcmp.eq.f32.partialorder %v512, 0.0
    %vm517 = vcmp.eq.f32.partialorder %v515, 0.0
    %v518 = vsel %vm516, 1.0, %v512
    %v519 = vsel %vm517, 1.0, %v515
    %v520 = vrcp.pop %v518
    %v521 = vrcp.pop %v519
    %v522 = vmul.f32 %v507, %v520
    %v523 = vmul.f32 %v509, %v521
    %v524 = vpack.c.bf16 %v522, %v522
    %v525 = vpack.c.bf16 %v523, %v523
    %526 = vrot.lane.b32.xlu0 %v119, 56
    %v527 = vpop.permute.xlu0 %526
    %v529 = vsel %vm122, %v524, 0
    %v532 = vsel %vm253, %v527, 0
    %534 = vmatprep.subr.bf16.mxu0 0
    %535 = vmatpush1.bf16.msra.mxu0 %v532
    %536 = vmatprep.subr.bf16.mxu0 0
    %537 = vmatpush1.bf16.msra.mxu0 0
    %538 = vmatprep.subr.bf16.mxu0 0
    %539 = vmatpush1.bf16.msra.mxu0 0
    %540 = vmatprep.subr.bf16.mxu0 0
    %541 = vmatpush1.bf16.msra.mxu0 0
    %542 = vmatprep.subr.bf16.mxu0 0
    %543 = vmatpush1.bf16.msra.mxu0 0
    %544 = vmatprep.subr.bf16.mxu0 0
    %545 = vmatpush1.bf16.msra.mxu0 0
    %546 = vmatprep.subr.bf16.mxu0 0
    %547 = vmatpush1.bf16.msra.mxu0 0
    %548 = vmatprep.subr.bf16.mxu0 0
    %549 = vmatpush1.bf16.msra.mxu0 0
    %550 = vmatprep.subr.bf16.mxu0 0
    %551 = vmatpush1.bf16.msra.mxu0 0
    %552 = vmatprep.subr.bf16.mxu0 0
    %553 = vmatpush1.bf16.msra.mxu0 0
    %554 = vmatprep.subr.bf16.mxu0 0
    %555 = vmatpush1.bf16.msra.mxu0 0
    %556 = vmatprep.subr.bf16.mxu0 0
    %557 = vmatpush1.bf16.msra.mxu0 0
    %558 = vmatprep.subr.bf16.mxu0 0
    %559 = vmatpush1.bf16.msra.mxu0 0
    %560 = vmatprep.subr.bf16.mxu0 0
    %561 = vmatpush1.bf16.msra.mxu0 0
    %562 = vmatprep.subr.bf16.mxu0 0
    %563 = vmatpush1.bf16.msra.mxu0 0
    %564 = vmatprep.subr.bf16.mxu0 0
    %565 = vmatpush1.bf16.msra.mxu0 0
    %566 = vmatprep.mubr.bf16.mxu0 0
    %567 = vmatmul.mubr.bf16.gmra.mrb[0].mxu0 %v529
    %v568 = vpop.f32.mrb[0].mxu0
    %v569 = vadd.f32 0.0, %v568
    %v570 = vpop.f32.mrb[0].mxu0
    %v571 = vpop.f32.mrb[0].mxu0
    %v572 = vpop.f32.mrb[0].mxu0
    %573 = vdwg.mxu0
    %574 = vrot.lane.b32.xlu0 %v169, 56
    %v575 = vpop.permute.xlu0 %574
    %v577 = vsel %vm122, %v525, 0
    %v580 = vsel %vm253, %v575, 0
    %582 = vmatprep.subr.bf16.mxu0 0
    %583 = vmatpush1.bf16.msra.mxu0 %v580
    %584 = vmatprep.subr.bf16.mxu0 0
    %585 = vmatpush1.bf16.msra.mxu0 0
    %586 = vmatprep.subr.bf16.mxu0 0
    %587 = vmatpush1.bf16.msra.mxu0 0
    %588 = vmatprep.subr.bf16.mxu0 0
    %589 = vmatpush1.bf16.msra.mxu0 0
    %590 = vmatprep.subr.bf16.mxu0 0
    %591 = vmatpush1.bf16.msra.mxu0 0
    %592 = vmatprep.subr.bf16.mxu0 0
    %593 = vmatpush1.bf16.msra.mxu0 0
    %594 = vmatprep.subr.bf16.mxu0 0
    %595 = vmatpush1.bf16.msra.mxu0 0
    %596 = vmatprep.subr.bf16.mxu0 0
    %597 = vmatpush1.bf16.msra.mxu0 0
    %598 = vmatprep.subr.bf16.mxu0 0
    %599 = vmatpush1.bf16.msra.mxu0 0
    %600 = vmatprep.subr.bf16.mxu0 0
    %601 = vmatpush1.bf16.msra.mxu0 0
    %602 = vmatprep.subr.bf16.mxu0 0
    %603 = vmatpush1.bf16.msra.mxu0 0
    %604 = vmatprep.subr.bf16.mxu0 0
    %605 = vmatpush1.bf16.msra.mxu0 0
    %606 = vmatprep.subr.bf16.mxu0 0
    %607 = vmatpush1.bf16.msra.mxu0 0
    %608 = vmatprep.subr.bf16.mxu0 0
    %609 = vmatpush1.bf16.msra.mxu0 0
    %610 = vmatprep.subr.bf16.mxu0 0
    %611 = vmatpush1.bf16.msra.mxu0 0
    %612 = vmatprep.subr.bf16.mxu0 0
    %613 = vmatpush1.bf16.msra.mxu0 0
    %614 = vmatprep.mubr.bf16.mxu0 0
    %615 = vmatmul.mubr.bf16.gmra.mrb[0].mxu0 %v577
    %v616 = vpop.f32.mrb[0].mxu0
    %v617 = vadd.f32 0.0, %v616
    %v618 = vpop.f32.mrb[0].mxu0
    %v619 = vpop.f32.mrb[0].mxu0
    %v620 = vpop.f32.mrb[0].mxu0
    %621 = vdwg.mxu0
    %v622 = vpack.c.bf16 %v617, %v569
    %v623 = vld [vmem:[%s3 + $0x4] sm:$0xf]
    %v625 = vsel %vm122, %v622, 0
    %v628 = vsel %vm253, %v623, 0
    %630 = vmatprep.subr.bf16.mxu0 0
    %631 = vmatpush1.bf16.msra.mxu0 %v628
    %632 = vmatprep.subr.bf16.mxu0 0
    %633 = vmatpush1.bf16.msra.mxu0 0
    %634 = vmatprep.subr.bf16.mxu0 0
    %635 = vmatpush1.bf16.msra.mxu0 0
    %636 = vmatprep.subr.bf16.mxu0 0
    %637 = vmatpush1.bf16.msra.mxu0 0
    %638 = vmatprep.subr.bf16.mxu0 0
    %639 = vmatpush1.bf16.msra.mxu0 0
    %640 = vmatprep.subr.bf16.mxu0 0
    %641 = vmatpush1.bf16.msra.mxu0 0
    %642 = vmatprep.subr.bf16.mxu0 0
    %643 = vmatpush1.bf16.msra.mxu0 0
    %644 = vmatprep.subr.bf16.mxu0 0
    %645 = vmatpush1.bf16.msra.mxu0 0
    %646 = vmatprep.subr.bf16.mxu0 0
    %647 = vmatpush1.bf16.msra.mxu0 0
    %648 = vmatprep.subr.bf16.mxu0 0
    %649 = vmatpush1.bf16.msra.mxu0 0
    %650 = vmatprep.subr.bf16.mxu0 0
    %651 = vmatpush1.bf16.msra.mxu0 0
    %652 = vmatprep.subr.bf16.mxu0 0
    %653 = vmatpush1.bf16.msra.mxu0 0
    %654 = vmatprep.subr.bf16.mxu0 0
    %655 = vmatpush1.bf16.msra.mxu0 0
    %656 = vmatprep.subr.bf16.mxu0 0
    %657 = vmatpush1.bf16.msra.mxu0 0
    %658 = vmatprep.subr.bf16.mxu0 0
    %659 = vmatpush1.bf16.msra.mxu0 0
    %660 = vmatprep.subr.bf16.mxu0 0
    %661 = vmatpush1.bf16.msra.mxu0 0
    %662 = vmatprep.mubr.bf16.mxu0 0
    %663 = vmatmul.mubr.bf16.gmra.mrb[0].mxu0 %v625
    %v664 = vpop.f32.mrb[0].mxu0
    %v665 = vadd.f32 0.0, %v664
    %v666 = vpop.f32.mrb[0].mxu0
    %v667 = vpop.f32.mrb[0].mxu0
    %v668 = vadd.f32 0.0, %v667
    %v669 = vpop.f32.mrb[0].mxu0
    %670 = vdwg.mxu0
    %v671 = vadd.f32 %v394, %v665
    %v672 = vadd.f32 %v395, %v668
    %673 = vrot.lane.b32.xlu0 %v114, 112
    %v674 = vpop.permute.xlu0 %673
    %675 = vrot.lane.b32.xlu0 %v119, 80
    %v676 = vpop.permute.xlu0 %675
    %v678 = vsel %vm122, %v674, 0
    %v681 = vsel %vm122, %v676, 0
    %683 = vmatprep.subr.bf16.mxu0 0
    %684 = vmatpush1.bf16.xpose.msra.mxu0 %v681
    %685 = vmatprep.subr.bf16.mxu0 0
    %686 = vmatpush1.bf16.xpose.msra.mxu0 0
    %687 = vmatprep.subr.bf16.mxu0 0
    %688 = vmatpush1.bf16.xpose.msra.mxu0 0
    %689 = vmatprep.subr.bf16.mxu0 0
    %690 = vmatpush1.bf16.xpose.msra.mxu0 0
    %691 = vmatprep.subr.bf16.mxu0 0
    %692 = vmatpush1.bf16.xpose.msra.mxu0 0
    %693 = vmatprep.subr.bf16.mxu0 0
    %694 = vmatpush1.bf16.xpose.msra.mxu0 0
    %695 = vmatprep.subr.bf16.mxu0 0
    %696 = vmatpush1.bf16.xpose.msra.mxu0 0
    %697 = vmatprep.subr.bf16.mxu0 0
    %698 = vmatpush1.bf16.xpose.msra.mxu0 0
    %699 = vmatprep.subr.bf16.mxu0 0
    %700 = vmatpush1.bf16.xpose.msra.mxu0 0
    %701 = vmatprep.subr.bf16.mxu0 0
    %702 = vmatpush1.bf16.xpose.msra.mxu0 0
    %703 = vmatprep.subr.bf16.mxu0 0
    %704 = vmatpush1.bf16.xpose.msra.mxu0 0
    %705 = vmatprep.subr.bf16.mxu0 0
    %706 = vmatpush1.bf16.xpose.msra.mxu0 0
    %707 = vmatprep.subr.bf16.mxu0 0
    %708 = vmatpush1.bf16.xpose.msra.mxu0 0
    %709 = vmatprep.subr.bf16.mxu0 0
    %710 = vmatpush1.bf16.xpose.msra.mxu0 0
    %711 = vmatprep.subr.bf16.mxu0 0
    %712 = vmatpush1.bf16.xpose.msra.mxu0 0
    %713 = vmatprep.subr.bf16.mxu0 0
    %714 = vmatpush1.bf16.xpose.msra.mxu0 0
    %715 = vmatprep.mubr.bf16.mxu0 0
    %716 = vmatmul.mubr.bf16.gmra.mrb[0].mxu0 %v678
    %v717 = vpop.f32.mrb[0].mxu0
    %v718 = vadd.f32 %v44, %v717
    %v719 = vpop.f32.mrb[0].mxu0
    %v720 = vpop.f32.mrb[0].mxu0
    %v721 = vpop.f32.mrb[0].mxu0
    %722 = vdwg.mxu0
    %723 = vrot.lane.b32.xlu0 %v115, 112
    %v724 = vpop.permute.xlu0 %723
    %725 = vrot.lane.b32.xlu0 %v169, 80
    %v726 = vpop.permute.xlu0 %725
    %v728 = vsel %vm122, %v724, 0
    %v731 = vsel %vm122, %v726, 0
    %733 = vmatprep.subr.bf16.mxu0 0
    %734 = vmatpush1.bf16.xpose.msra.mxu0 %v731
    %735 = vmatprep.subr.bf16.mxu0 0
    %736 = vmatpush1.bf16.xpose.msra.mxu0 0
    %737 = vmatprep.subr.bf16.mxu0 0
    %738 = vmatpush1.bf16.xpose.msra.mxu0 0
    %739 = vmatprep.subr.bf16.mxu0 0
    %740 = vmatpush1.bf16.xpose.msra.mxu0 0
    %741 = vmatprep.subr.bf16.mxu0 0
    %742 = vmatpush1.bf16.xpose.msra.mxu0 0
    %743 = vmatprep.subr.bf16.mxu0 0
    %744 = vmatpush1.bf16.xpose.msra.mxu0 0
    %745 = vmatprep.subr.bf16.mxu0 0
    %746 = vmatpush1.bf16.xpose.msra.mxu0 0
    %747 = vmatprep.subr.bf16.mxu0 0
    %748 = vmatpush1.bf16.xpose.msra.mxu0 0
    %749 = vmatprep.subr.bf16.mxu0 0
    %750 = vmatpush1.bf16.xpose.msra.mxu0 0
    %751 = vmatprep.subr.bf16.mxu0 0
    %752 = vmatpush1.bf16.xpose.msra.mxu0 0
    %753 = vmatprep.subr.bf16.mxu0 0
    %754 = vmatpush1.bf16.xpose.msra.mxu0 0
    %755 = vmatprep.subr.bf16.mxu0 0
    %756 = vmatpush1.bf16.xpose.msra.mxu0 0
    %757 = vmatprep.subr.bf16.mxu0 0
    %758 = vmatpush1.bf16.xpose.msra.mxu0 0
    %759 = vmatprep.subr.bf16.mxu0 0
    %760 = vmatpush1.bf16.xpose.msra.mxu0 0
    %761 = vmatprep.subr.bf16.mxu0 0
    %762 = vmatpush1.bf16.xpose.msra.mxu0 0
    %763 = vmatprep.subr.bf16.mxu0 0
    %764 = vmatpush1.bf16.xpose.msra.mxu0 0
    %765 = vmatprep.mubr.bf16.mxu0 0
    %766 = vmatmul.mubr.bf16.gmra.mrb[0].mxu0 %v728
    %v767 = vpop.f32.mrb[0].mxu0
    %v768 = vadd.f32 %v44, %v767
    %v769 = vpop.f32.mrb[0].mxu0
    %v770 = vpop.f32.mrb[0].mxu0
    %v771 = vpop.f32.mrb[0].mxu0
    %772 = vdwg.mxu0
    %v773 = vsel %vm122, %v718, -inf
    %774 = vmax.xlane.f32.xlu0 %v773
    %v775 = vpop.xlane.xlu0 %774
    %v776 = vsel %vm122, %v768, -inf
    %777 = vmax.xlane.f32.xlu0 %v776
    %v778 = vpop.xlane.xlu0 %777
    %v779 = vmax.f32 %v775, -1e+30
    %v780 = vmax.f32 %v778, -1e+30
    %v781 = vsub.f32 %v718, %v779
    %v782 = vsub.f32 %v768, %v780
    %v783 = vmul.f32 %v781, 1.442695
    %v784 = vpow.pop %v783
    %v785 = vmul.f32 %v782, 1.442695
    %v786 = vpow.pop %v785
    %v787 = vsel %vm122, %v784, 0.0
    %788 = vadd.xlane.f32.xlu0 %v787
    %v789 = vpop.xlane.xlu0 %788
    %v790 = vsel %vm122, %v786, 0.0
    %791 = vadd.xlane.f32.xlu0 %v790
    %v792 = vpop.xlane.xlu0 %791
    %vm793 = vcmp.eq.f32.partialorder %v789, 0.0
    %vm794 = vcmp.eq.f32.partialorder %v792, 0.0
    %v795 = vsel %vm793, 1.0, %v789
    %v796 = vsel %vm794, 1.0, %v792
    %v797 = vrcp.pop %v795
    %v798 = vrcp.pop %v796
    %v799 = vmul.f32 %v784, %v797
    %v800 = vmul.f32 %v786, %v798
    %v801 = vpack.c.bf16 %v799, %v799
    %v802 = vpack.c.bf16 %v800, %v800
    %803 = vrot.lane.b32.xlu0 %v119, 48
    %v804 = vpop.permute.xlu0 %803
    %v806 = vsel %vm122, %v801, 0
    %v809 = vsel %vm253, %v804, 0
    %811 = vmatprep.subr.bf16.mxu0 0
    %812 = vmatpush1.bf16.msra.mxu0 %v809
    %813 = vmatprep.subr.bf16.mxu0 0
    %814 = vmatpush1.bf16.msra.mxu0 0
    %815 = vmatprep.subr.bf16.mxu0 0
    %816 = vmatpush1.bf16.msra.mxu0 0
    %817 = vmatprep.subr.bf16.mxu0 0
    %818 = vmatpush1.bf16.msra.mxu0 0
    %819 = vmatprep.subr.bf16.mxu0 0
    %820 = vmatpush1.bf16.msra.mxu0 0
    %821 = vmatprep.subr.bf16.mxu0 0
    %822 = vmatpush1.bf16.msra.mxu0 0
    %823 = vmatprep.subr.bf16.mxu0 0
    %824 = vmatpush1.bf16.msra.mxu0 0
    %825 = vmatprep.subr.bf16.mxu0 0
    %826 = vmatpush1.bf16.msra.mxu0 0
    %827 = vmatprep.subr.bf16.mxu0 0
    %828 = vmatpush1.bf16.msra.mxu0 0
    %829 = vmatprep.subr.bf16.mxu0 0
    %830 = vmatpush1.bf16.msra.mxu0 0
    %831 = vmatprep.subr.bf16.mxu0 0
    %832 = vmatpush1.bf16.msra.mxu0 0
    %833 = vmatprep.subr.bf16.mxu0 0
    %834 = vmatpush1.bf16.msra.mxu0 0
    %835 = vmatprep.subr.bf16.mxu0 0
    %836 = vmatpush1.bf16.msra.mxu0 0
    %837 = vmatprep.subr.bf16.mxu0 0
    %838 = vmatpush1.bf16.msra.mxu0 0
    %839 = vmatprep.subr.bf16.mxu0 0
    %840 = vmatpush1.bf16.msra.mxu0 0
    %841 = vmatprep.subr.bf16.mxu0 0
    %842 = vmatpush1.bf16.msra.mxu0 0
    %843 = vmatprep.mubr.bf16.mxu0 0
    %844 = vmatmul.mubr.bf16.gmra.mrb[0].mxu0 %v806
    %v845 = vpop.f32.mrb[0].mxu0
    %v846 = vadd.f32 0.0, %v845
    %v847 = vpop.f32.mrb[0].mxu0
    %v848 = vpop.f32.mrb[0].mxu0
    %v849 = vpop.f32.mrb[0].mxu0
    %850 = vdwg.mxu0
    %851 = vrot.lane.b32.xlu0 %v169, 48
    %v852 = vpop.permute.xlu0 %851
    %v854 = vsel %vm122, %v802, 0
    %v857 = vsel %vm253, %v852, 0
    %859 = vmatprep.subr.bf16.mxu0 0
    %860 = vmatpush1.bf16.msra.mxu0 %v857
    %861 = vmatprep.subr.bf16.mxu0 0
    %862 = vmatpush1.bf16.msra.mxu0 0
    %863 = vmatprep.subr.bf16.mxu0 0
    %864 = vmatpush1.bf16.msra.mxu0 0
    %865 = vmatprep.subr.bf16.mxu0 0
    %866 = vmatpush1.bf16.msra.mxu0 0
    %867 = vmatprep.subr.bf16.mxu0 0
    %868 = vmatpush1.bf16.msra.mxu0 0
    %869 = vmatprep.subr.bf16.mxu0 0
    %870 = vmatpush1.bf16.msra.mxu0 0
    %871 = vmatprep.subr.bf16.mxu0 0
    %872 = vmatpush1.bf16.msra.mxu0 0
    %873 = vmatprep.subr.bf16.mxu0 0
    %874 = vmatpush1.bf16.msra.mxu0 0
    %875 = vmatprep.subr.bf16.mxu0 0
    %876 = vmatpush1.bf16.msra.mxu0 0
    %877 = vmatprep.subr.bf16.mxu0 0
    %878 = vmatpush1.bf16.msra.mxu0 0
    %879 = vmatprep.subr.bf16.mxu0 0
    %880 = vmatpush1.bf16.msra.mxu0 0
    %881 = vmatprep.subr.bf16.mxu0 0
    %882 = vmatpush1.bf16.msra.mxu0 0
    %883 = vmatprep.subr.bf16.mxu0 0
    %884 = vmatpush1.bf16.msra.mxu0 0
    %885 = vmatprep.subr.bf16.mxu0 0
    %886 = vmatpush1.bf16.msra.mxu0 0
    %887 = vmatprep.subr.bf16.mxu0 0
    %888 = vmatpush1.bf16.msra.mxu0 0
    %889 = vmatprep.subr.bf16.mxu0 0
    %890 = vmatpush1.bf16.msra.mxu0 0
    %891 = vmatprep.mubr.bf16.mxu0 0
    %892 = vmatmul.mubr.bf16.gmra.mrb[0].mxu0 %v854
    %v893 = vpop.f32.mrb[0].mxu0
    %v894 = vadd.f32 0.0, %v893
    %v895 = vpop.f32.mrb[0].mxu0
    %v896 = vpop.f32.mrb[0].mxu0
    %v897 = vpop.f32.mrb[0].mxu0
    %898 = vdwg.mxu0
    %v899 = vpack.c.bf16 %v894, %v846
    %v900 = vld [vmem:[%s3 + $0x8] sm:$0xf]
    %v902 = vsel %vm122, %v899, 0
    %v905 = vsel %vm253, %v900, 0
    %907 = vmatprep.subr.bf16.mxu0 0
    %908 = vmatpush1.bf16.msra.mxu0 %v905
    %909 = vmatprep.subr.bf16.mxu0 0
    %910 = vmatpush1.bf16.msra.mxu0 0
    %911 = vmatprep.subr.bf16.mxu0 0
    %912 = vmatpush1.bf16.msra.mxu0 0
    %913 = vmatprep.subr.bf16.mxu0 0
    %914 = vmatpush1.bf16.msra.mxu0 0
    %915 = vmatprep.subr.bf16.mxu0 0
    %916 = vmatpush1.bf16.msra.mxu0 0
    %917 = vmatprep.subr.bf16.mxu0 0
    %918 = vmatpush1.bf16.msra.mxu0 0
    %919 = vmatprep.subr.bf16.mxu0 0
    %920 = vmatpush1.bf16.msra.mxu0 0
    %921 = vmatprep.subr.bf16.mxu0 0
    %922 = vmatpush1.bf16.msra.mxu0 0
    %923 = vmatprep.subr.bf16.mxu0 0
    %924 = vmatpush1.bf16.msra.mxu0 0
    %925 = vmatprep.subr.bf16.mxu0 0
    %926 = vmatpush1.bf16.msra.mxu0 0
    %927 = vmatprep.subr.bf16.mxu0 0
    %928 = vmatpush1.bf16.msra.mxu0 0
    %929 = vmatprep.subr.bf16.mxu0 0
    %930 = vmatpush1.bf16.msra.mxu0 0
    %931 = vmatprep.subr.bf16.mxu0 0
    %932 = vmatpush1.bf16.msra.mxu0 0
    %933 = vmatprep.subr.bf16.mxu0 0
    %934 = vmatpush1.bf16.msra.mxu0 0
    %935 = vmatprep.subr.bf16.mxu0 0
    %936 = vmatpush1.bf16.msra.mxu0 0
    %937 = vmatprep.subr.bf16.mxu0 0
    %938 = vmatpush1.bf16.msra.mxu0 0
    %939 = vmatprep.mubr.bf16.mxu0 0
    %940 = vmatmul.mubr.bf16.gmra.mrb[0].mxu0 %v902
    %v941 = vpop.f32.mrb[0].mxu0
    %v942 = vadd.f32 0.0, %v941
    %v943 = vpop.f32.mrb[0].mxu0
    %v944 = vpop.f32.mrb[0].mxu0
    %v945 = vadd.f32 0.0, %v944
    %v946 = vpop.f32.mrb[0].mxu0
    %947 = vdwg.mxu0
    %v948 = vadd.f32 %v671, %v942
    %v949 = vadd.f32 %v672, %v945
    %950 = vrot.lane.b32.xlu0 %v114, 104
    %v951 = vpop.permute.xlu0 %950
    %952 = vrot.lane.b32.xlu0 %v119, 72
    %v953 = vpop.permute.xlu0 %952
    %v955 = vsel %vm122, %v951, 0
    %v958 = vsel %vm122, %v953, 0
    %960 = vmatprep.subr.bf16.mxu0 0
    %961 = vmatpush1.bf16.xpose.msra.mxu0 %v958
    %962 = vmatprep.subr.bf16.mxu0 0
    %963 = vmatpush1.bf16.xpose.msra.mxu0 0
    %964 = vmatprep.subr.bf16.mxu0 0
    %965 = vmatpush1.bf16.xpose.msra.mxu0 0
    %966 = vmatprep.subr.bf16.mxu0 0
    %967 = vmatpush1.bf16.xpose.msra.mxu0 0
    %968 = vmatprep.subr.bf16.mxu0 0
    %969 = vmatpush1.bf16.xpose.msra.mxu0 0
    %970 = vmatprep.subr.bf16.mxu0 0
    %971 = vmatpush1.bf16.xpose.msra.mxu0 0
    %972 = vmatprep.subr.bf16.mxu0 0
    %973 = vmatpush1.bf16.xpose.msra.mxu0 0
    %974 = vmatprep.subr.bf16.mxu0 0
    %975 = vmatpush1.bf16.xpose.msra.mxu0 0
    %976 = vmatprep.subr.bf16.mxu0 0
    %977 = vmatpush1.bf16.xpose.msra.mxu0 0
    %978 = vmatprep.subr.bf16.mxu0 0
    %979 = vmatpush1.bf16.xpose.msra.mxu0 0
    %980 = vmatprep.subr.bf16.mxu0 0
    %981 = vmatpush1.bf16.xpose.msra.mxu0 0
    %982 = vmatprep.subr.bf16.mxu0 0
    %983 = vmatpush1.bf16.xpose.msra.mxu0 0
    %984 = vmatprep.subr.bf16.mxu0 0
    %985 = vmatpush1.bf16.xpose.msra.mxu0 0
    %986 = vmatprep.subr.bf16.mxu0 0
    %987 = vmatpush1.bf16.xpose.msra.mxu0 0
    %988 = vmatprep.subr.bf16.mxu0 0
    %989 = vmatpush1.bf16.xpose.msra.mxu0 0
    %990 = vmatprep.subr.bf16.mxu0 0
    %991 = vmatpush1.bf16.xpose.msra.mxu0 0
    %992 = vmatprep.mubr.bf16.mxu0 0
    %993 = vmatmul.mubr.bf16.gmra.mrb[0].mxu0 %v955
    %v994 = vpop.f32.mrb[0].mxu0
    %v995 = vadd.f32 %v44, %v994
    %v996 = vpop.f32.mrb[0].mxu0
    %v997 = vpop.f32.mrb[0].mxu0
    %v998 = vpop.f32.mrb[0].mxu0
    %999 = vdwg.mxu0
    %1000 = vrot.lane.b32.xlu0 %v115, 104
    %v1001 = vpop.permute.xlu0 %1000
    %1002 = vrot.lane.b32.xlu0 %v169, 72
    %v1003 = vpop.permute.xlu0 %1002
    %v1005 = vsel %vm122, %v1001, 0
    %v1008 = vsel %vm122, %v1003, 0
    %1010 = vmatprep.subr.bf16.mxu0 0
    %1011 = vmatpush1.bf16.xpose.msra.mxu0 %v1008
    %1012 = vmatprep.subr.bf16.mxu0 0
    %1013 = vmatpush1.bf16.xpose.msra.mxu0 0
    %1014 = vmatprep.subr.bf16.mxu0 0
    %1015 = vmatpush1.bf16.xpose.msra.mxu0 0
    %1016 = vmatprep.subr.bf16.mxu0 0
    %1017 = vmatpush1.bf16.xpose.msra.mxu0 0
    %1018 = vmatprep.subr.bf16.mxu0 0
    %1019 = vmatpush1.bf16.xpose.msra.mxu0 0
    %1020 = vmatprep.subr.bf16.mxu0 0
    %1021 = vmatpush1.bf16.xpose.msra.mxu0 0
    %1022 = vmatprep.subr.bf16.mxu0 0
    %1023 = vmatpush1.bf16.xpose.msra.mxu0 0
    %1024 = vmatprep.subr.bf16.mxu0 0
    %1025 = vmatpush1.bf16.xpose.msra.mxu0 0
    %1026 = vmatprep.subr.bf16.mxu0 0
    %1027 = vmatpush1.bf16.xpose.msra.mxu0 0
    %1028 = vmatprep.subr.bf16.mxu0 0
    %1029 = vmatpush1.bf16.xpose.msra.mxu0 0
    %1030 = vmatprep.subr.bf16.mxu0 0
    %1031 = vmatpush1.bf16.xpose.msra.mxu0 0
    %1032 = vmatprep.subr.bf16.mxu0 0
    %1033 = vmatpush1.bf16.xpose.msra.mxu0 0
    %1034 = vmatprep.subr.bf16.mxu0 0
    %1035 = vmatpush1.bf16.xpose.msra.mxu0 0
    %1036 = vmatprep.subr.bf16.mxu0 0
    %1037 = vmatpush1.bf16.xpose.msra.mxu0 0
    %1038 = vmatprep.subr.bf16.mxu0 0
    %1039 = vmatpush1.bf16.xpose.msra.mxu0 0
    %1040 = vmatprep.subr.bf16.mxu0 0
    %1041 = vmatpush1.bf16.xpose.msra.mxu0 0
    %1042 = vmatprep.mubr.bf16.mxu0 0
    %1043 = vmatmul.mubr.bf16.gmra.mrb[0].mxu0 %v1005
    %v1044 = vpop.f32.mrb[0].mxu0
    %v1045 = vadd.f32 %v44, %v1044
    %v1046 = vpop.f32.mrb[0].mxu0
    %v1047 = vpop.f32.mrb[0].mxu0
    %v1048 = vpop.f32.mrb[0].mxu0
    %1049 = vdwg.mxu0
    %v1050 = vsel %vm122, %v995, -inf
    %1051 = vmax.xlane.f32.xlu0 %v1050
    %v1052 = vpop.xlane.xlu0 %1051
    %v1053 = vsel %vm122, %v1045, -inf
    %1054 = vmax.xlane.f32.xlu0 %v1053
    %v1055 = vpop.xlane.xlu0 %1054
    %v1056 = vmax.f32 %v1052, -1e+30
    %v1057 = vmax.f32 %v1055, -1e+30
    %v1058 = vsub.f32 %v995, %v1056
    %v1059 = vsub.f32 %v1045, %v1057
    %v1060 = vmul.f32 %v1058, 1.442695
    %v1061 = vpow.pop %v1060
    %v1062 = vmul.f32 %v1059, 1.442695
    %v1063 = vpow.pop %v1062
    %v1064 = vsel %vm122, %v1061, 0.0
    %1065 = vadd.xlane.f32.xlu0 %v1064
    %v1066 = vpop.xlane.xlu0 %1065
    %v1067 = vsel %vm122, %v1063, 0.0
    %1068 = vadd.xlane.f32.xlu0 %v1067
    %v1069 = vpop.xlane.xlu0 %1068
    %vm1070 = vcmp.eq.f32.partialorder %v1066, 0.0
    %vm1071 = vcmp.eq.f32.partialorder %v1069, 0.0
    %v1072 = vsel %vm1070, 1.0, %v1066
    %v1073 = vsel %vm1071, 1.0, %v1069
    %v1074 = vrcp.pop %v1072
    %v1075 = vrcp.pop %v1073
    %v1076 = vmul.f32 %v1061, %v1074
    %v1077 = vmul.f32 %v1063, %v1075
    %v1078 = vpack.c.bf16 %v1076, %v1076
    %v1079 = vpack.c.bf16 %v1077, %v1077
    %1080 = vrot.lane.b32.xlu0 %v119, 40
    %v1081 = vpop.permute.xlu0 %1080
    %v1083 = vsel %vm122, %v1078, 0
    %v1086 = vsel %vm253, %v1081, 0
    %1088 = vmatprep.subr.bf16.mxu0 0
    %1089 = vmatpush1.bf16.msra.mxu0 %v1086
    %1090 = vmatprep.subr.bf16.mxu0 0
    %1091 = vmatpush1.bf16.msra.mxu0 0
    %1092 = vmatprep.subr.bf16.mxu0 0
    %1093 = vmatpush1.bf16.msra.mxu0 0
    %1094 = vmatprep.subr.bf16.mxu0 0
    %1095 = vmatpush1.bf16.msra.mxu0 0
    %1096 = vmatprep.subr.bf16.mxu0 0
    %1097 = vmatpush1.bf16.msra.mxu0 0
    %1098 = vmatprep.subr.bf16.mxu0 0
    %1099 = vmatpush1.bf16.msra.mxu0 0
    %1100 = vmatprep.subr.bf16.mxu0 0
    %1101 = vmatpush1.bf16.msra.mxu0 0
    %1102 = vmatprep.subr.bf16.mxu0 0
    %1103 = vmatpush1.bf16.msra.mxu0 0
    %1104 = vmatprep.subr.bf16.mxu0 0
    %1105 = vmatpush1.bf16.msra.mxu0 0
    %1106 = vmatprep.subr.bf16.mxu0 0
    %1107 = vmatpush1.bf16.msra.mxu0 0
    %1108 = vmatprep.subr.bf16.mxu0 0
    %1109 = vmatpush1.bf16.msra.mxu0 0
    %1110 = vmatprep.subr.bf16.mxu0 0
    %1111 = vmatpush1.bf16.msra.mxu0 0
    %1112 = vmatprep.subr.bf16.mxu0 0
    %1113 = vmatpush1.bf16.msra.mxu0 0
    %1114 = vmatprep.subr.bf16.mxu0 0
    %1115 = vmatpush1.bf16.msra.mxu0 0
    %1116 = vmatprep.subr.bf16.mxu0 0
    %1117 = vmatpush1.bf16.msra.mxu0 0
    %1118 = vmatprep.subr.bf16.mxu0 0
    %1119 = vmatpush1.bf16.msra.mxu0 0
    %1120 = vmatprep.mubr.bf16.mxu0 0
    %1121 = vmatmul.mubr.bf16.gmra.mrb[0].mxu0 %v1083
    %v1122 = vpop.f32.mrb[0].mxu0
    %v1123 = vadd.f32 0.0, %v1122
    %v1124 = vpop.f32.mrb[0].mxu0
    %v1125 = vpop.f32.mrb[0].mxu0
    %v1126 = vpop.f32.mrb[0].mxu0
    %1127 = vdwg.mxu0
    %1128 = vrot.lane.b32.xlu0 %v169, 40
    %v1129 = vpop.permute.xlu0 %1128
    %v1131 = vsel %vm122, %v1079, 0
    %v1134 = vsel %vm253, %v1129, 0
    %1136 = vmatprep.subr.bf16.mxu0 0
    %1137 = vmatpush1.bf16.msra.mxu0 %v1134
    %1138 = vmatprep.subr.bf16.mxu0 0
    %1139 = vmatpush1.bf16.msra.mxu0 0
    %1140 = vmatprep.subr.bf16.mxu0 0
    %1141 = vmatpush1.bf16.msra.mxu0 0
    %1142 = vmatprep.subr.bf16.mxu0 0
    %1143 = vmatpush1.bf16.msra.mxu0 0
    %1144 = vmatprep.subr.bf16.mxu0 0
    %1145 = vmatpush1.bf16.msra.mxu0 0
    %1146 = vmatprep.subr.bf16.mxu0 0
    %1147 = vmatpush1.bf16.msra.mxu0 0
    %1148 = vmatprep.subr.bf16.mxu0 0
    %1149 = vmatpush1.bf16.msra.mxu0 0
    %1150 = vmatprep.subr.bf16.mxu0 0
    %1151 = vmatpush1.bf16.msra.mxu0 0
    %1152 = vmatprep.subr.bf16.mxu0 0
    %1153 = vmatpush1.bf16.msra.mxu0 0
    %1154 = vmatprep.subr.bf16.mxu0 0
    %1155 = vmatpush1.bf16.msra.mxu0 0
    %1156 = vmatprep.subr.bf16.mxu0 0
    %1157 = vmatpush1.bf16.msra.mxu0 0
    %1158 = vmatprep.subr.bf16.mxu0 0
    %1159 = vmatpush1.bf16.msra.mxu0 0
    %1160 = vmatprep.subr.bf16.mxu0 0
    %1161 = vmatpush1.bf16.msra.mxu0 0
    %1162 = vmatprep.subr.bf16.mxu0 0
    %1163 = vmatpush1.bf16.msra.mxu0 0
    %1164 = vmatprep.subr.bf16.mxu0 0
    %1165 = vmatpush1.bf16.msra.mxu0 0
    %1166 = vmatprep.subr.bf16.mxu0 0
    %1167 = vmatpush1.bf16.msra.mxu0 0
    %1168 = vmatprep.mubr.bf16.mxu0 0
    %1169 = vmatmul.mubr.bf16.gmra.mrb[0].mxu0 %v1131
    %v1170 = vpop.f32.mrb[0].mxu0
    %v1171 = vadd.f32 0.0, %v1170
    %v1172 = vpop.f32.mrb[0].mxu0
    %v1173 = vpop.f32.mrb[0].mxu0
    %v1174 = vpop.f32.mrb[0].mxu0
    %1175 = vdwg.mxu0
    %v1176 = vpack.c.bf16 %v1171, %v1123
    %v1177 = vld [vmem:[%s3 + $0xc] sm:$0xf]
    %v1179 = vsel %vm122, %v1176, 0
    %v1182 = vsel %vm253, %v1177, 0
    %1184 = vmatprep.subr.bf16.mxu0 0
    %1185 = vmatpush1.bf16.msra.mxu0 %v1182
    %1186 = vmatprep.subr.bf16.mxu0 0
    %1187 = vmatpush1.bf16.msra.mxu0 0
    %1188 = vmatprep.subr.bf16.mxu0 0
    %1189 = vmatpush1.bf16.msra.mxu0 0
    %1190 = vmatprep.subr.bf16.mxu0 0
    %1191 = vmatpush1.bf16.msra.mxu0 0
    %1192 = vmatprep.subr.bf16.mxu0 0
    %1193 = vmatpush1.bf16.msra.mxu0 0
    %1194 = vmatprep.subr.bf16.mxu0 0
    %1195 = vmatpush1.bf16.msra.mxu0 0
    %1196 = vmatprep.subr.bf16.mxu0 0
    %1197 = vmatpush1.bf16.msra.mxu0 0
    %1198 = vmatprep.subr.bf16.mxu0 0
    %1199 = vmatpush1.bf16.msra.mxu0 0
    %1200 = vmatprep.subr.bf16.mxu0 0
    %1201 = vmatpush1.bf16.msra.mxu0 0
    %1202 = vmatprep.subr.bf16.mxu0 0
    %1203 = vmatpush1.bf16.msra.mxu0 0
    %1204 = vmatprep.subr.bf16.mxu0 0
    %1205 = vmatpush1.bf16.msra.mxu0 0
    %1206 = vmatprep.subr.bf16.mxu0 0
    %1207 = vmatpush1.bf16.msra.mxu0 0
    %1208 = vmatprep.subr.bf16.mxu0 0
    %1209 = vmatpush1.bf16.msra.mxu0 0
    %1210 = vmatprep.subr.bf16.mxu0 0
    %1211 = vmatpush1.bf16.msra.mxu0 0
    %1212 = vmatprep.subr.bf16.mxu0 0
    %1213 = vmatpush1.bf16.msra.mxu0 0
    %1214 = vmatprep.subr.bf16.mxu0 0
    %1215 = vmatpush1.bf16.msra.mxu0 0
    %1216 = vmatprep.mubr.bf16.mxu0 0
    %1217 = vmatmul.mubr.bf16.gmra.mrb[0].mxu0 %v1179
    %v1218 = vpop.f32.mrb[0].mxu0
    %v1219 = vadd.f32 0.0, %v1218
    %v1220 = vpop.f32.mrb[0].mxu0
    %v1221 = vpop.f32.mrb[0].mxu0
    %v1222 = vadd.f32 0.0, %v1221
    %v1223 = vpop.f32.mrb[0].mxu0
    %1224 = vdwg.mxu0
    %v1225 = vadd.f32 %v948, %v1219
    %v1226 = vadd.f32 %v949, %v1222
    %v1227 = vld [vmem:[%s4] sm:$0x1]
    %v1228 = vld [vmem:[%s5] sm:$0x1]
    %v1229 = vsel %vm62, %v1225, 0.0
    %1230 = vadd.xlane.f32.xlu0 %v1229
    %v1231 = vpop.xlane.xlu0 %1230
    %v1232 = vsel %vm62, %v1226, 0.0
    %1233 = vadd.xlane.f32.xlu0 %v1232
    %v1234 = vpop.xlane.xlu0 %1233
    %v1235 = vrcp.pop 32.0
    %v1236 = vmul.f32 %v1231, %v1235
    %v1237 = vmul.f32 %v1234, %v1235
    %v1238 = vsub.f32 %v1225, %v1236
    %v1239 = vsub.f32 %v1226, %v1237
    %v1240 = vmul.f32 %v1238, %v1238
    %v1241 = vmul.f32 %v1239, %v1239
    %v1242 = vsel %vm62, %v1240, 0.0
    %1243 = vadd.xlane.f32.xlu0 %v1242
    %v1244 = vpop.xlane.xlu0 %1243
    %v1245 = vsel %vm62, %v1241, 0.0
    %1246 = vadd.xlane.f32.xlu0 %v1245
    %v1247 = vpop.xlane.xlu0 %1246
    %v1248 = vmul.f32 %v1244, %v1235
    %v1249 = vmul.f32 %v1247, %v1235
    %v1250 = vadd.f32 %v1248, 1e-05
    %v1251 = vadd.f32 %v1249, 1e-05
    %v1252 = vrsqrt.pop %v1250
    %v1253 = vrsqrt.pop %v1251
    %v1254 = vmul.f32 %v1238, %v1252
    %v1255 = vmul.f32 %v1239, %v1253
    %v1257 = vlaneseq
    %v1258 = vshrl.u32 %v1257, 7
    %v1259 = vsub.s32 0, %v1258
    %v1260 = vrot.slane %v1227, %v1259
    %v1262 = vmul.f32 %v1254, %v1260
    %v1263 = vmul.f32 %v1255, %v1260
    %v1265 = vlaneseq
    %v1266 = vshrl.u32 %v1265, 7
    %v1267 = vsub.s32 0, %v1266
    %v1268 = vrot.slane %v1228, %v1267
    %v1270 = vadd.f32 %v1262, %v1268
    %v1271 = vadd.f32 %v1263, %v1268
    %v1272 = vpack.c.bf16 %v1271, %v1270
    %v1273 = vld [vmem:[%s6] sm:$0xf]
    %v1274 = vld [vmem:[%s6 + $0x4] sm:$0xf]
    %v1275 = vld [vmem:[%s6 + $0x8] sm:$0xf]
    %v1276 = vld [vmem:[%s6 + $0xc] sm:$0xf]
    %v1277 = vld [vmem:[%s7] sm:$0x1]
    %v1279 = vlaneseq
    %v1280 = vshrl.u32 %v1279, 7
    %v1281 = vsub.s32 0, %v1280
    %v1282 = vrot.slane %v1277, %v1281
    %v1288 = vunpack.c.l.b16 %v1273
    %v1289 = vunpack.c.l.b16 %v1274
    %v1290 = vunpack.c.l.b16 %v1275
    %v1291 = vunpack.c.l.b16 %v1276
    %v1292 = vpack.c.b16 %v1289, %v1288
    %v1293 = vpack.c.b16 %v1291, %v1290
    %v1297 = vsel %vm62, %v1272, 0
    %1299 = vmatprep.subr.bf16.mxu0 0
    %1300 = vmatpush1.bf16.msra.mxu0 %v1292
    %1301 = vmatprep.subr.bf16.mxu0 0
    %1302 = vmatpush1.bf16.msra.mxu0 %v1293
    %1303 = vmatprep.subr.bf16.mxu0 0
    %1304 = vmatpush1.bf16.msra.mxu0 0
    %1305 = vmatprep.subr.bf16.mxu0 0
    %1306 = vmatpush1.bf16.msra.mxu0 0
    %1307 = vmatprep.subr.bf16.mxu0 0
    %1308 = vmatpush1.bf16.msra.mxu0 0
    %1309 = vmatprep.subr.bf16.mxu0 0
    %1310 = vmatpush1.bf16.msra.mxu0 0
    %1311 = vmatprep.subr.bf16.mxu0 0
    %1312 = vmatpush1.bf16.msra.mxu0 0
    %1313 = vmatprep.subr.bf16.mxu0 0
    %1314 = vmatpush1.bf16.msra.mxu0 0
    %1315 = vmatprep.subr.bf16.mxu0 0
    %1316 = vmatpush1.bf16.msra.mxu0 0
    %1317 = vmatprep.subr.bf16.mxu0 0
    %1318 = vmatpush1.bf16.msra.mxu0 0
    %1319 = vmatprep.subr.bf16.mxu0 0
    %1320 = vmatpush1.bf16.msra.mxu0 0
    %1321 = vmatprep.subr.bf16.mxu0 0
    %1322 = vmatpush1.bf16.msra.mxu0 0
    %1323 = vmatprep.subr.bf16.mxu0 0
    %1324 = vmatpush1.bf16.msra.mxu0 0
    %1325 = vmatprep.subr.bf16.mxu0 0
    %1326 = vmatpush1.bf16.msra.mxu0 0
    %1327 = vmatprep.subr.bf16.mxu0 0
    %1328 = vmatpush1.bf16.msra.mxu0 0
    %1329 = vmatprep.subr.bf16.mxu0 0
    %1330 = vmatpush1.bf16.msra.mxu0 0
    %1331 = vmatprep.mubr.bf16.mxu0 0
    %1332 = vmatmul.mubr.bf16.gmra.mrb[0].mxu0 %v1297
    %v1333 = vpop.f32.mrb[0].mxu0
    %v1334 = vadd.f32 %v1282, %v1333
    %v1335 = vpop.f32.mrb[0].mxu0
    %v1336 = vpop.f32.mrb[0].mxu0
    %v1337 = vadd.f32 %v1282, %v1336
    %v1338 = vpop.f32.mrb[0].mxu0
    %1339 = vdwg.mxu0
    %v1340 = vld [vmem:[#allocation2] sm:$0x1]
    %vm1341 = vcmp.ge.f32.partialorder %v1334, 0.0
    %vm1342 = vcmp.ge.f32.partialorder %v1337, 0.0
    %v1344 = vlaneseq
    %v1345 = vshrl.u32 %v1344, 7
    %v1346 = vsub.s32 0, %v1345
    %v1347 = vrot.slane %v1340, %v1346
    %1348 = vset.pattern.permute.xlu0 0
    %1349 = vperm.xlu0 %1348, %v1347
    %v1350 = vpop.permute.xlu0 %1349
    %v1352 = vmul.f32 %v1334, %v1350
    %v1353 = vmul.f32 %v1337, %v1350
    %v1354 = vsel %vm1341, %v1334, %v1352
    %v1355 = vsel %vm1342, %v1337, %v1353
    %v1356 = vpack.c.bf16 %v1355, %v1354
    %v1357 = vld [vmem:[%s9] sm:$0xf]
    %v1358 = vld [vmem:[%s9 + $0x4] sm:$0xf]
    %v1359 = vld [vmem:[%s9 + $0x8] sm:$0xf]
    %v1360 = vld [vmem:[%s9 + $0xc] sm:$0xf]
    %v1361 = vld [vmem:[%s9 + $0x10] sm:$0xf]
    %v1362 = vld [vmem:[%s9 + $0x14] sm:$0xf]
    %v1363 = vld [vmem:[%s9 + $0x18] sm:$0xf]
    %v1364 = vld [vmem:[%s9 + $0x1c] sm:$0xf]
    %v1365 = vld [vmem:[%s9 + $0x20] sm:$0xf]
    %v1366 = vld [vmem:[%s9 + $0x24] sm:$0xf]
    %v1367 = vld [vmem:[%s9 + $0x28] sm:$0xf]
    %v1368 = vld [vmem:[%s9 + $0x2c] sm:$0xf]
    %v1369 = vld [vmem:[%s9 + $0x30] sm:$0xf]
    %v1370 = vld [vmem:[%s9 + $0x34] sm:$0xf]
    %v1371 = vld [vmem:[%s9 + $0x38] sm:$0xf]
    %v1372 = vld [vmem:[%s9 + $0x3c] sm:$0xf]
    %v1373 = vld [vmem:[%s10] sm:$0x1]
    %v1375 = vlaneseq
    %v1376 = vshrl.u32 %v1375, 7
    %v1377 = vsub.s32 0, %v1376
    %v1378 = vrot.slane %v1373, %v1377
    %v1396 = vunpack.c.l.b16 %v1357
    %v1397 = vunpack.c.l.b16 %v1358
    %v1398 = vunpack.c.l.b16 %v1359
    %v1399 = vunpack.c.l.b16 %v1360
    %v1400 = vunpack.c.l.b16 %v1361
    %v1401 = vunpack.c.l.b16 %v1362
    %v1402 = vunpack.c.l.b16 %v1363
    %v1403 = vunpack.c.l.b16 %v1364
    %v1404 = vunpack.c.l.b16 %v1365
    %v1405 = vunpack.c.l.b16 %v1366
    %v1406 = vunpack.c.l.b16 %v1367
    %v1407 = vunpack.c.l.b16 %v1368
    %v1408 = vunpack.c.l.b16 %v1369
    %v1409 = vunpack.c.l.b16 %v1370
    %v1410 = vunpack.c.l.b16 %v1371
    %v1411 = vunpack.c.l.b16 %v1372
    %v1412 = vpack.c.b16 %v1397, %v1396
    %v1413 = vpack.c.b16 %v1399, %v1398
    %v1414 = vpack.c.b16 %v1401, %v1400
    %v1415 = vpack.c.b16 %v1403, %v1402
    %v1416 = vpack.c.b16 %v1405, %v1404
    %v1417 = vpack.c.b16 %v1407, %v1406
    %v1418 = vpack.c.b16 %v1409, %v1408
    %v1419 = vpack.c.b16 %v1411, %v1410
    %1428 = vmatprep.subr.bf16.mxu0 0
    %1429 = vmatpush1.bf16.msra.mxu0 %v1412
    %1430 = vmatprep.subr.bf16.mxu0 0
    %1431 = vmatpush1.bf16.msra.mxu0 %v1413
    %1432 = vmatprep.subr.bf16.mxu0 0
    %1433 = vmatpush1.bf16.msra.mxu0 %v1414
    %1434 = vmatprep.subr.bf16.mxu0 0
    %1435 = vmatpush1.bf16.msra.mxu0 %v1415
    %1436 = vmatprep.subr.bf16.mxu0 0
    %1437 = vmatpush1.bf16.msra.mxu0 %v1416
    %1438 = vmatprep.subr.bf16.mxu0 0
    %1439 = vmatpush1.bf16.msra.mxu0 %v1417
    %1440 = vmatprep.subr.bf16.mxu0 0
    %1441 = vmatpush1.bf16.msra.mxu0 %v1418
    %1442 = vmatprep.subr.bf16.mxu0 0
    %1443 = vmatpush1.bf16.msra.mxu0 %v1419
    %1444 = vmatprep.subr.bf16.mxu0 0
    %1445 = vmatpush1.bf16.msra.mxu0 0
    %1446 = vmatprep.subr.bf16.mxu0 0
    %1447 = vmatpush1.bf16.msra.mxu0 0
    %1448 = vmatprep.subr.bf16.mxu0 0
    %1449 = vmatpush1.bf16.msra.mxu0 0
    %1450 = vmatprep.subr.bf16.mxu0 0
    %1451 = vmatpush1.bf16.msra.mxu0 0
    %1452 = vmatprep.subr.bf16.mxu0 0
    %1453 = vmatpush1.bf16.msra.mxu0 0
    %1454 = vmatprep.subr.bf16.mxu0 0
    %1455 = vmatpush1.bf16.msra.mxu0 0
    %1456 = vmatprep.subr.bf16.mxu0 0
    %1457 = vmatpush1.bf16.msra.mxu0 0
    %1458 = vmatprep.subr.bf16.mxu0 0
    %1459 = vmatpush1.bf16.msra.mxu0 0
    %1460 = vmatprep.mubr.bf16.mxu0 0
    %1461 = vmatmul.mubr.bf16.gmra.mrb[0].mxu0 %v1356
    %v1462 = vpop.f32.mrb[0].mxu0
    %v1463 = vadd.f32 %v1378, %v1462
    %v1464 = vpop.f32.mrb[0].mxu0
    %v1465 = vpop.f32.mrb[0].mxu0
    %v1466 = vadd.f32 %v1378, %v1465
    %v1467 = vpop.f32.mrb[0].mxu0
    %1468 = vdwg.mxu0
    %v1469 = vadd.f32 %v1463, %v1270
    %v1470 = vadd.f32 %v1466, %v1271
    %v1471 = vsel %vm62, %v1469, 0.0
    %1472 = vadd.xlane.f32.xlu0 %v1471
    %v1473 = vpop.xlane.xlu0 %1472
    %v1474 = vsel %vm62, %v1470, 0.0
    %1475 = vadd.xlane.f32.xlu0 %v1474
    %v1476 = vpop.xlane.xlu0 %1475
    %v1477 = vmul.f32 %v1473, %v1235
    %v1478 = vmul.f32 %v1476, %v1235
    %v1479 = vsub.f32 %v1469, %v1477
    %v1480 = vsub.f32 %v1470, %v1478
    %v1481 = vmul.f32 %v1479, %v1479
    %v1482 = vmul.f32 %v1480, %v1480
    %v1483 = vsel %vm62, %v1481, 0.0
    %1484 = vadd.xlane.f32.xlu0 %v1483
    %v1485 = vpop.xlane.xlu0 %1484
    %v1486 = vsel %vm62, %v1482, 0.0
    %1487 = vadd.xlane.f32.xlu0 %v1486
    %v1488 = vpop.xlane.xlu0 %1487
    %v1489 = vmul.f32 %v1485, %v1235
    %v1490 = vmul.f32 %v1488, %v1235
    %v1491 = vadd.f32 %v1489, 1e-05
    %v1492 = vadd.f32 %v1490, 1e-05
    %v1493 = vrsqrt.pop %v1491
    %v1494 = vrsqrt.pop %v1492
    %v1495 = vmul.f32 %v1479, %v1493
    %v1496 = vmul.f32 %v1480, %v1494
    %v1497 = vmul.f32 %v1495, %v1260
    %v1498 = vmul.f32 %v1496, %v1260
    %v1499 = vadd.f32 %v1497, %v1268
    %v1500 = vadd.f32 %v1498, %v1268
    %1501 = vst.msk [vmem:[#allocation3] sm:$0xff] %vm62, %v1499
    %1502 = vst.msk [vmem:[#allocation3 + $0x8] sm:$0xff] %vm62, %v1500
    // Predicated region
    $region46: #{tpu_custom_call.1} parent=1 // pred_check
      _
    $region47: #{tpu_custom_call.1} parent=1 // pred_check_branch
      %1504 = sbr.rel (0) target = $region49
    $region48: #{tpu_custom_call.1} parent=1 // pred_region
      %s1506 = ssub.s32 256, 256
      %1507 = vsyncadd [#allocation4], %s1506
      %s1508 = sshll.u32 [#allocation3], 4
      %s1509 = int_to_ptr.vmem [resolvable:$true] %s1508
      %1514 = dma.vmem_to_hbm [thread:$0]  %s1509, 256, %s11, [#allocation4], 128, 128, 8
    $region49: #{tpu_custom_call.1} parent=1 // pred_fallthru
      _
    // Predicated region
    $region50: #{tpu_custom_call.1} parent=1 // pred_check
      _
    $region51: #{tpu_custom_call.1} parent=1 // pred_check_branch
      %1516 = sbr.rel (0) target = $region53
    $region52: #{tpu_custom_call.1} parent=1 // pred_region
      %1517 = dma.done [#allocation4], 256
    $region53: #{tpu_custom_call.1} parent=1 // pred_fallthru
      _
    %1518 = vsyncpa [#allocation4], 1

</llo_original>
